<compile_context>
chip_gen: v6e
topology: v6e:2x2x1
jax: 0.10.0
libtpu: 0.0.40
codegen_flags: <defaults>
</compile_context>

<pallas_src>
import functools

import jax
import jax.numpy as jnp
from jax.experimental import pallas as pl
from jax.experimental.pallas import tpu as pltpu

Z_DIM = 128
HIDDEN = 750         # true hidden_dim from the PyTorch module
HIDDEN_PAD = 768     # padded to a multiple of 128 for aligned tiles / DMA
LEAK = 0.2
BM_CAP = 1024        # large-batch tile (multiple of 256); ~8 MiB VMEM/step on all gens
INT8_BATCH_MAX = 1024  # at/below this the kernel is weight-DMA bound -> int8 w2 pays off


def _round_up(n, m):
    return ((n + m - 1) // m) * m


def code_disc_kernel(x_ref, w1_ref, b1_ref, w2_ref, s2_ref, b2_ref,
                     w3_ref, b3_ref, o_ref, *, w2_is_int8):
    x = x_ref[...]                                       # (bm, Z_DIM) f32

    # Linear 1 (bf16 MXU, f32 accumulate) + LeakyReLU(0.2)
    h = jnp.dot(x.astype(jnp.bfloat16), w1_ref[...],
                preferred_element_type=jnp.float32) + b1_ref[...]
    h = jnp.where(h > 0, h, LEAK * h)

    # Linear 2 + LeakyReLU(0.2)
    if w2_is_int8:
        # int8 weights halve the dominant weight DMA.  int8 -> bf16 is exact
        # (|q| <= 127 < 2^8); per-output-column dequant scale folded into the
        # f32 accumulator after the matmul.
        w2 = w2_ref[...].astype(jnp.bfloat16)
        h = jnp.dot(h.astype(jnp.bfloat16), w2,
                    preferred_element_type=jnp.float32) * s2_ref[...] + b2_ref[...]
    else:
        h = jnp.dot(h.astype(jnp.bfloat16), w2_ref[...],
                    preferred_element_type=jnp.float32) + b2_ref[...]
    h = jnp.where(h > 0, h, LEAK * h)

    # Linear 3 (out_features == 1): VPU multiply + lane reduction instead of a
    # 1-lane-wide MXU matmul.  w3/b3 are f32 (no bf16 round-trip).
    logit = jnp.sum(h * w3_ref[...], axis=-1, keepdims=True) + b3_ref[...]

    # Sigmoid (EUP exp path).
    o_ref[...] = jax.nn.sigmoid(logit).astype(o_ref.dtype)


def prepare_params(params):
    """Pad 750 -> 768 (zeros); w1 bf16; w2 both bf16 and int8(+scales); w3/b3 f32."""
    w1, b1, w2, b2, w3, b3 = params
    pad = HIDDEN_PAD - HIDDEN

    w1p = jnp.pad(w1, ((0, 0), (0, pad))).astype(jnp.bfloat16)          # (128, 768) bf16
    b1p = jnp.pad(b1, ((0, pad),)).reshape(1, HIDDEN_PAD)                # (1, 768) f32

    w2p = jnp.pad(w2, ((0, pad), (0, pad))).astype(jnp.float32)          # (768, 768) f32
    w2_bf16 = w2p.astype(jnp.bfloat16)                                   # large-B path
    # Symmetric int8 quantization, per output column (padded columns are all-zero -> q=0).
    absmax = jnp.max(jnp.abs(w2p), axis=0, keepdims=True)                # (1, 768)
    s2 = jnp.maximum(absmax / 127.0, 1e-12).astype(jnp.float32)          # (1, 768) f32
    w2_i8 = jnp.clip(jnp.round(w2p / s2), -127, 127).astype(jnp.int8)    # (768, 768) i8

    b2p = jnp.pad(b2, ((0, pad),)).reshape(1, HIDDEN_PAD)                # (1, 768) f32
    w3p = jnp.pad(w3.reshape(1, HIDDEN), ((0, 0), (0, pad))).astype(jnp.float32)  # (1, 768) f32
    b3p = b3.reshape(1, 1).astype(jnp.float32)                           # (1, 1) f32

    return dict(w1=w1p, b1=b1p, w2_bf16=w2_bf16, w2_i8=w2_i8, s2=s2,
                b2=b2p, w3=w3p, b3=b3p)


def code_discriminator(x, kp):
    """x: (B, Z_DIM) float32 -> (B, 1) float32. kp from prepare_params."""
    B = x.shape[0]

    # Batch tiling: only x/out blocked along batch; weights have a constant block
    # index so they stay VMEM-resident across grid steps.
    bm = BM_CAP if B >= BM_CAP else _round_up(B, 8)
    Bp = _round_up(B, bm)
    if Bp != B:
        x = jnp.pad(x, ((0, Bp - B), (0, 0)))
    num_steps = Bp // bm

    # Small/medium batch => weight-DMA bound => int8 w2.  Large batch => bf16 w2
    # (no per-step dequant work on the compute-bound path).
    use_int8 = B <= INT8_BATCH_MAX
    w2 = kp["w2_i8"] if use_int8 else kp["w2_bf16"]

    # "parallel" lets v7x's 2 TensorCores split the batch tiles; harmless on 1-TC chips.
    semantics = ("parallel",) if num_steps > 1 else ("arbitrary",)

    def full(arr):
        nd = arr.ndim
        return pl.BlockSpec(arr.shape, lambda i, _nd=nd: (0,) * _nd)

    flops = 2 * Bp * (Z_DIM * HIDDEN_PAD + HIDDEN_PAD * HIDDEN_PAD + HIDDEN_PAD)
    bytes_accessed = (
        w2.size * w2.dtype.itemsize            # w2 (int8 or bf16)
        + 2 * kp["w1"].size                    # w1 bf16
        + 4 * (kp["w3"].size + kp["s2"].size + kp["b1"].size + kp["b2"].size + 1)
        + 4 * Bp * Z_DIM + 4 * Bp              # x in, out
    )
    cost = pl.CostEstimate(flops=flops, transcendentals=Bp,
                           bytes_accessed=bytes_accessed)

    kernel = functools.partial(code_disc_kernel, w2_is_int8=use_int8)

    out = pl.pallas_call(
        kernel,
        out_shape=jax.ShapeDtypeStruct((Bp, 1), jnp.float32),
        grid_spec=pltpu.PrefetchScalarGridSpec(
            num_scalar_prefetch=0,
            grid=(num_steps,),
            in_specs=[
                pl.BlockSpec((bm, Z_DIM), lambda i: (i, 0)),
                full(kp["w1"]), full(kp["b1"]),
                full(w2), full(kp["s2"]), full(kp["b2"]),
                full(kp["w3"]), full(kp["b3"]),
            ],
            out_specs=pl.BlockSpec((bm, 1), lambda i: (i, 0)),
        ),
        compiler_params=pltpu.CompilerParams(dimension_semantics=semantics),
        cost_estimate=cost,
    )(x, kp["w1"], kp["b1"], w2, kp["s2"], kp["b2"], kp["w3"], kp["b3"])

    return out[:B]


def init_params(key):
    """Deterministic init mimicking PyTorch nn.Linear default
    (U[-1/sqrt(in), 1/sqrt(in)]). Weights as (in, out), biases as (out,)."""
    ks = jax.random.split(key, 6)

    def lin(kw, kb, fan_in, fan_out):
        bound = 1.0 / jnp.sqrt(float(fan_in))
        w = jax.random.uniform(kw, (fan_in, fan_out), jnp.float32, -bound, bound)
        b = jax.random.uniform(kb, (fan_out,), jnp.float32, -bound, bound)
        return w, b

    w1, b1 = lin(ks[0], ks[1], Z_DIM, HIDDEN)
    w2, b2 = lin(ks[2], ks[3], HIDDEN, HIDDEN)
    w3, b3 = lin(ks[4], ks[5], HIDDEN, 1)
    return (w1, b1, w2, b2, w3, b3)


def reference_forward(x, params):
    """Pure f32 reference at the true HIDDEN=750 width."""
    w1, b1, w2, b2, w3, b3 = params
    h = x @ w1 + b1
    h = jnp.where(h > 0, h, LEAK * h)
    h = h @ w2 + b2
    h = jnp.where(h > 0, h, LEAK * h)
    return jax.nn.sigmoid(h @ w3 + b3.reshape(1, 1))


if __name__ == "__main__":
    key = jax.random.PRNGKey(0)
    k_param, k_x = jax.random.split(key)

    params = init_params(k_param)            # f32, PyTorch-shaped semantics
    kernel_params = prepare_params(params)   # padded + bf16/int8 for the kernel

    B = 8  # small batch (exercises the int8-w2, weight-DMA-bound path)
    x = jax.random.normal(k_x, (B, Z_DIM), jnp.float32)

    out = jax.block_until_ready(code_discriminator(x, kernel_params))

    ref = reference_forward(x, params)
    assert out.shape == (B, 1)
    # bf16 activations + int8 w2 vs. pure-f32 reference; sigmoid output in [0, 1].
    assert jnp.allclose(out, ref, atol=1e-2, rtol=1e-2), (out, ref)

    print("KERNEL_OK")
</pallas_src>

<mosaic_0001>
module attributes {stable_mosaic.version = 11 : i64} {
  func.func @code_disc_kernel(%arg0: i32, %arg1: memref<8x128xf32, #tpu.memory_space<vmem>>, %arg2: memref<128x768xbf16, #tpu.memory_space<vmem>>, %arg3: memref<1x768xf32, #tpu.memory_space<vmem>>, %arg4: memref<768x768xi8, #tpu.memory_space<vmem>>, %arg5: memref<1x768xf32, #tpu.memory_space<vmem>>, %arg6: memref<1x768xf32, #tpu.memory_space<vmem>>, %arg7: memref<1x768xf32, #tpu.memory_space<vmem>>, %arg8: memref<1x1xf32, #tpu.memory_space<vmem>>, %arg9: memref<8x1xf32, #tpu.memory_space<vmem>>) attributes {dimension_semantics = [#tpu.dimension_semantics<arbitrary>], iteration_bounds = array<i64: 1>, scalar_prefetch = 0 : i64, scratch_operands = 0 : i64, tpu.core_type = #tpu.core_type<tc>, window_params = [{transform_indices = @transform_0, window_bounds = array<i64: 8, 128>}, {pipeline_mode = #tpu.pipeline_mode<synchronous>, transform_indices = @transform_1, window_bounds = array<i64: 128, 768>}, {pipeline_mode = #tpu.pipeline_mode<synchronous>, transform_indices = @transform_2, window_bounds = array<i64: 1, 768>}, {pipeline_mode = #tpu.pipeline_mode<synchronous>, transform_indices = @transform_3, window_bounds = array<i64: 768, 768>}, {pipeline_mode = #tpu.pipeline_mode<synchronous>, transform_indices = @transform_4, window_bounds = array<i64: 1, 768>}, {pipeline_mode = #tpu.pipeline_mode<synchronous>, transform_indices = @transform_5, window_bounds = array<i64: 1, 768>}, {pipeline_mode = #tpu.pipeline_mode<synchronous>, transform_indices = @transform_6, window_bounds = array<i64: 1, 768>}, {pipeline_mode = #tpu.pipeline_mode<synchronous>, transform_indices = @transform_7, window_bounds = array<i64: 1, 1>}, {transform_indices = @transform_8, window_bounds = array<i64: 8, 1>}]} {
    %c0 = arith.constant 0 : index
    %c0_0 = arith.constant 0 : index
    %0 = vector.load %arg1[%c0, %c0_0] : memref<8x128xf32, #tpu.memory_space<vmem>>, vector<8x128xf32>
    %1 = arith.truncf %0 : vector<8x128xf32> to vector<8x128xbf16>
    %c0_1 = arith.constant 0 : index
    %c0_2 = arith.constant 0 : index
    %2 = vector.load %arg2[%c0_1, %c0_2] : memref<128x768xbf16, #tpu.memory_space<vmem>>, vector<128x768xbf16>
    %cst = arith.constant dense<0.000000e+00> : vector<8x768xf32>
    %3 = tpu.matmul %1, %2, %cst {dimension_numbers = #tpu.dot_dimension_numbers<[1], [0], [0], [1], [0, 0, 1, 1], [], []>} : vector<8x128xbf16>, vector<128x768xbf16>, vector<8x768xf32> -> vector<8x768xf32>
    %c0_3 = arith.constant 0 : index
    %c0_4 = arith.constant 0 : index
    %4 = vector.load %arg3[%c0_3, %c0_4] : memref<1x768xf32, #tpu.memory_space<vmem>>, vector<1x768xf32>
    %5 = vector.broadcast %4 : vector<1x768xf32> to vector<8x768xf32>
    %6 = arith.addf %3, %5 : vector<8x768xf32>
    %cst_5 = arith.constant 0.000000e+00 : f32
    %7 = vector.broadcast %cst_5 : f32 to vector<8x768xf32>
    %8 = arith.cmpf ogt, %6, %7 : vector<8x768xf32>
    %cst_6 = arith.constant 2.000000e-01 : f32
    %9 = vector.broadcast %cst_6 : f32 to vector<8x768xf32>
    %10 = arith.mulf %9, %6 : vector<8x768xf32>
    %11 = arith.select %8, %6, %10 : vector<8x768xi1>, vector<8x768xf32>
    %c0_7 = arith.constant 0 : index
    %c0_8 = arith.constant 0 : index
    %12 = vector.load %arg4[%c0_7, %c0_8] : memref<768x768xi8, #tpu.memory_space<vmem>>, vector<768x768xi8>
    %13 = arith.sitofp %12 : vector<768x768xi8> to vector<768x768xbf16>
    %14 = arith.truncf %11 : vector<8x768xf32> to vector<8x768xbf16>
    %cst_9 = arith.constant dense<0.000000e+00> : vector<8x768xf32>
    %15 = tpu.matmul %14, %13, %cst_9 {dimension_numbers = #tpu.dot_dimension_numbers<[1], [0], [0], [1], [0, 0, 1, 1], [], []>} : vector<8x768xbf16>, vector<768x768xbf16>, vector<8x768xf32> -> vector<8x768xf32>
    %c0_10 = arith.constant 0 : index
    %c0_11 = arith.constant 0 : index
    %16 = vector.load %arg5[%c0_10, %c0_11] : memref<1x768xf32, #tpu.memory_space<vmem>>, vector<1x768xf32>
    %17 = vector.broadcast %16 : vector<1x768xf32> to vector<8x768xf32>
    %18 = arith.mulf %15, %17 : vector<8x768xf32>
    %c0_12 = arith.constant 0 : index
    %c0_13 = arith.constant 0 : index
    %19 = vector.load %arg6[%c0_12, %c0_13] : memref<1x768xf32, #tpu.memory_space<vmem>>, vector<1x768xf32>
    %20 = vector.broadcast %19 : vector<1x768xf32> to vector<8x768xf32>
    %21 = arith.addf %18, %20 : vector<8x768xf32>
    %cst_14 = arith.constant 0.000000e+00 : f32
    %22 = vector.broadcast %cst_14 : f32 to vector<8x768xf32>
    %23 = arith.cmpf ogt, %21, %22 : vector<8x768xf32>
    %cst_15 = arith.constant 2.000000e-01 : f32
    %24 = vector.broadcast %cst_15 : f32 to vector<8x768xf32>
    %25 = arith.mulf %24, %21 : vector<8x768xf32>
    %26 = arith.select %23, %21, %25 : vector<8x768xi1>, vector<8x768xf32>
    %c0_16 = arith.constant 0 : index
    %c0_17 = arith.constant 0 : index
    %27 = vector.load %arg7[%c0_16, %c0_17] : memref<1x768xf32, #tpu.memory_space<vmem>>, vector<1x768xf32>
    %28 = vector.broadcast %27 : vector<1x768xf32> to vector<8x768xf32>
    %29 = arith.mulf %26, %28 : vector<8x768xf32>
    %cst_18 = arith.constant dense<0.000000e+00> : vector<8xf32>
    %30 = vector.multi_reduction <add>, %29, %cst_18 [1] : vector<8x768xf32> to vector<8xf32>
    %31 = vector.shape_cast %30 : vector<8xf32> to vector<8x1xf32>
    %c0_19 = arith.constant 0 : index
    %c0_20 = arith.constant 0 : index
    %32 = vector.load %arg8[%c0_19, %c0_20] : memref<1x1xf32, #tpu.memory_space<vmem>>, vector<1x1xf32>
    %33 = vector.broadcast %32 : vector<1x1xf32> to vector<8x1xf32>
    %34 = arith.addf %31, %33 : vector<8x1xf32>
    %35 = arith.negf %34 : vector<8x1xf32>
    %36 = math.exp %35 : vector<8x1xf32>
    %cst_21 = arith.constant 1.000000e+00 : f32
    %37 = vector.broadcast %cst_21 : f32 to vector<8x1xf32>
    %38 = arith.addf %37, %36 : vector<8x1xf32>
    %39 = arith.divf %37, %38 : vector<8x1xf32>
    %c0_22 = arith.constant 0 : index
    %c0_23 = arith.constant 0 : index
    %40 = vector.load %arg9[%c0_22, %c0_23] : memref<8x1xf32, #tpu.memory_space<vmem>>, vector<8x1xf32>
    tpu.vector_store %arg9[%c0_22, %c0_23], %39 {strides = array<i32>} : memref<8x1xf32, #tpu.memory_space<vmem>>, vector<8x1xf32>,
    return
  }
  func.func @transform_0(%arg0: i32) -> (i32, i32) {
    %c0_i32 = arith.constant 0 : i32
    %c0_i32_0 = arith.constant 0 : i32
    return %arg0, %c0_i32 : i32, i32
  }
  func.func @transform_1(%arg0: i32) -> (i32, i32) {
    %c0_i32 = arith.constant 0 : i32
    %c0_i32_0 = arith.constant 0 : i32
    %c0_i32_1 = arith.constant 0 : i32
    return %c0_i32, %c0_i32_0 : i32, i32
  }
  func.func @transform_2(%arg0: i32) -> (i32, i32) {
    %c0_i32 = arith.constant 0 : i32
    %c0_i32_0 = arith.constant 0 : i32
    %c0_i32_1 = arith.constant 0 : i32
    return %c0_i32, %c0_i32_0 : i32, i32
  }
  func.func @transform_3(%arg0: i32) -> (i32, i32) {
    %c0_i32 = arith.constant 0 : i32
    %c0_i32_0 = arith.constant 0 : i32
    %c0_i32_1 = arith.constant 0 : i32
    return %c0_i32, %c0_i32_0 : i32, i32
  }
  func.func @transform_4(%arg0: i32) -> (i32, i32) {
    %c0_i32 = arith.constant 0 : i32
    %c0_i32_0 = arith.constant 0 : i32
    %c0_i32_1 = arith.constant 0 : i32
    return %c0_i32, %c0_i32_0 : i32, i32
  }
  func.func @transform_5(%arg0: i32) -> (i32, i32) {
    %c0_i32 = arith.constant 0 : i32
    %c0_i32_0 = arith.constant 0 : i32
    %c0_i32_1 = arith.constant 0 : i32
    return %c0_i32, %c0_i32_0 : i32, i32
  }
  func.func @transform_6(%arg0: i32) -> (i32, i32) {
    %c0_i32 = arith.constant 0 : i32
    %c0_i32_0 = arith.constant 0 : i32
    %c0_i32_1 = arith.constant 0 : i32
    return %c0_i32, %c0_i32_0 : i32, i32
  }
  func.func @transform_7(%arg0: i32) -> (i32, i32) {
    %c0_i32 = arith.constant 0 : i32
    %c0_i32_0 = arith.constant 0 : i32
    %c0_i32_1 = arith.constant 0 : i32
    return %c0_i32, %c0_i32_0 : i32, i32
  }
  func.func @transform_8(%arg0: i32) -> (i32, i32) {
    %c0_i32 = arith.constant 0 : i32
    %c0_i32_0 = arith.constant 0 : i32
    return %arg0, %c0_i32 : i32, i32
  }
}

</mosaic_0001>

<llo_original>
// kernel: tpu_custom_call.1
$region0: #{tpu_custom_call.1}
  #allocation0 [shape = 'u32[]', space=smem, size = 0x4, offset = 0x4, fixed_abs, tag = 'smem constant byte address 0x4 - core index']
  #allocation1 [shape = 'u32[144,128]{1,0:T(1,128)}', space=vmem, size = 0x12000, scoped, tag = 'internal scratch']
  #allocation2 [shape = 'f32[1,1]{1,0:T(1,128)S(1)}', space=vmem, size = 0x200, scoped, tag = 'scoped memory for tpu_custom_call.1']
  %s0 = inlined_call_operand.hbm [shape: f32[8,128], index: 0, kind: input, shape index: {}]
  %s1 = inlined_call_operand.hbm [shape: bf16[128,768], index: 1, kind: input, shape index: {}]
  %s2 = inlined_call_operand.hbm [shape: f32[1,768], index: 2, kind: input, shape index: {}]
  %s3 = inlined_call_operand.hbm [shape: s8[768,768], index: 3, kind: input, shape index: {}]
  %s4 = inlined_call_operand.vmem [shape: f32[1,768], index: 4, kind: input, shape index: {}]
  %s5 = inlined_call_operand.hbm [shape: f32[1,768], index: 5, kind: input, shape index: {}]
  %s6 = inlined_call_operand.vmem [shape: f32[1,768], index: 6, kind: input, shape index: {}]
  %s7 = inlined_call_operand.<no memory space> [shape: f32[1,1], index: 7, kind: input, shape index: {}]
  %s8 = inlined_call_operand.vmem [shape: f32[8,1], index: 8, kind: output, shape index: {}]
  %s9 = sld [smem:[#allocation0]]
  $region62: #{tpu_custom_call.1} parent=0
    _
  %s11 = ssub.s32 1, %s9
  %s12 = scalar_select 0, %s11, %s9
  %v13 = vstv %s7
  %14 = vst [vmem:[#allocation2] sm:$0x1] %v13
  $region1: #{tpu_custom_call.1} parent=0
    #allocation3 [shape = 'u8[4096]{0}', space=vmem, size = 0x1000, scoped, tag = 'input window, operand 0, single buffered']
    #allocation4 [shape = 's32[1]{0}', space=sflag, size = 0x4, scoped, tag = 'scoped memory for tpu_custom_call.1']
    #allocation5 [shape = 'u8[196608]{0}', space=vmem, size = 0x30000, scoped, tag = 'input window, operand 1, single buffered']
    #allocation6 [shape = 's32[1]{0}', space=sflag, size = 0x4, scoped, tag = 'scoped memory for tpu_custom_call.1']
    #allocation7 [shape = 'u8[3072]{0}', space=vmem, size = 0xc00, scoped, tag = 'input window, operand 2, single buffered']
    #allocation8 [shape = 'u8[589824]{0}', space=vmem, size = 0x90000, scoped, tag = 'input window, operand 3, single buffered']
    #allocation9 [shape = 's32[1]{0}', space=sflag, size = 0x4, scoped, tag = 'scoped memory for tpu_custom_call.1']
    #allocation10 [shape = 'u8[3072]{0}', space=vmem, size = 0xc00, scoped, tag = 'input window, operand 5, single buffered']
    %15 = vsyncpa [#allocation4], 0
    %16 = vsyncpa [#allocation6], 0
    %17 = vsyncpa [#allocation9], 0
    // Predicated region
    $region2: #{tpu_custom_call.1} parent=1 // pred_check
      _
    $region3: #{tpu_custom_call.1} parent=1 // pred_check_branch
      %19 = sbr.rel (0) target = $region5
    $region4: #{tpu_custom_call.1} parent=1 // pred_region
      %s21 = ssub.s32 128, 128
      %22 = vsyncadd [#allocation4], %s21
      %s24 = sshll.u32 [#allocation3], 4
      %s25 = int_to_ptr.vmem [resolvable:$true] %s24
      %27 = dma.hbm_to_vmem [thread:$0]  %s0, 128, %s25, [#allocation4]
    $region5: #{tpu_custom_call.1} parent=1 // pred_fallthru
      _
    // Predicated region
    $region6: #{tpu_custom_call.1} parent=1 // pred_check
      _
    $region7: #{tpu_custom_call.1} parent=1 // pred_check_branch
      %29 = sbr.rel (0) target = $region9
    $region8: #{tpu_custom_call.1} parent=1 // pred_region
      %s31 = ssub.s32 6144, 6144
      %32 = vsyncadd [#allocation6], %s31
      %s33 = sshll.u32 [#allocation5], 4
      %s34 = int_to_ptr.vmem [resolvable:$true] %s33
      %39 = dma.hbm_to_vmem [thread:$0]  %s1, 6144, %s34, [#allocation6], 384, 384, 24
    $region9: #{tpu_custom_call.1} parent=1 // pred_fallthru
      _
    // Predicated region
    $region10: #{tpu_custom_call.1} parent=1 // pred_check
      _
    $region11: #{tpu_custom_call.1} parent=1 // pred_check_branch
      %41 = sbr.rel (0) target = $region13
    $region12: #{tpu_custom_call.1} parent=1 // pred_region
      %s43 = ssub.s32 96, 96
      %44 = vsyncadd [#allocation6], %s43
      %s46 = sshll.u32 [#allocation7], 4
      %s47 = int_to_ptr.vmem [resolvable:$true] %s46
      %49 = dma.hbm_to_vmem [thread:$0]  %s2, 96, %s47, [#allocation6]
    $region13: #{tpu_custom_call.1} parent=1 // pred_fallthru
      _
    // Predicated region
    $region14: #{tpu_custom_call.1} parent=1 // pred_check
      _
    $region15: #{tpu_custom_call.1} parent=1 // pred_check_branch
      %51 = sbr.rel (0) target = $region17
    $region16: #{tpu_custom_call.1} parent=1 // pred_region
      %s53 = ssub.s32 18432, 18432
      %54 = vsyncadd [#allocation9], %s53
      %s55 = sshll.u32 [#allocation8], 4
      %s56 = int_to_ptr.vmem [resolvable:$true] %s55
      %61 = dma.hbm_to_vmem [thread:$0]  %s3, 18432, %s56, [#allocation9], 768, 768, 48
    $region17: #{tpu_custom_call.1} parent=1 // pred_fallthru
      _
    // Predicated region
    $region18: #{tpu_custom_call.1} parent=1 // pred_check
      _
    $region19: #{tpu_custom_call.1} parent=1 // pred_check_branch
      %63 = sbr.rel (0) target = $region21
    $region20: #{tpu_custom_call.1} parent=1 // pred_region
      _
    $region21: #{tpu_custom_call.1} parent=1 // pred_fallthru
      _
    // Predicated region
    $region22: #{tpu_custom_call.1} parent=1 // pred_check
      _
    $region23: #{tpu_custom_call.1} parent=1 // pred_check_branch
      %65 = sbr.rel (0) target = $region25
    $region24: #{tpu_custom_call.1} parent=1 // pred_region
      %s67 = ssub.s32 96, 96
      %68 = vsyncadd [#allocation9], %s67
      %s70 = sshll.u32 [#allocation10], 4
      %s71 = int_to_ptr.vmem [resolvable:$true] %s70
      %73 = dma.hbm_to_vmem [thread:$0]  %s5, 96, %s71, [#allocation9]
    $region25: #{tpu_custom_call.1} parent=1 // pred_fallthru
      _
    // Predicated region
    $region26: #{tpu_custom_call.1} parent=1 // pred_check
      _
    $region27: #{tpu_custom_call.1} parent=1 // pred_check_branch
      %75 = sbr.rel (0) target = $region29
    $region28: #{tpu_custom_call.1} parent=1 // pred_region
      _
    $region29: #{tpu_custom_call.1} parent=1 // pred_fallthru
      _
    // Predicated region
    $region30: #{tpu_custom_call.1} parent=1 // pred_check
      _
    $region31: #{tpu_custom_call.1} parent=1 // pred_check_branch
      %77 = sbr.rel (0) target = $region33
    $region32: #{tpu_custom_call.1} parent=1 // pred_region
      _
    $region33: #{tpu_custom_call.1} parent=1 // pred_fallthru
      _
    // Predicated region
    $region34: #{tpu_custom_call.1} parent=1 // pred_check
      _
    $region35: #{tpu_custom_call.1} parent=1 // pred_check_branch
      %79 = sbr.rel (0) target = $region37
    $region36: #{tpu_custom_call.1} parent=1 // pred_region
      %80 = dma.done [#allocation4], 128
    $region37: #{tpu_custom_call.1} parent=1 // pred_fallthru
      _
    // Predicated region
    $region38: #{tpu_custom_call.1} parent=1 // pred_check
      _
    $region39: #{tpu_custom_call.1} parent=1 // pred_check_branch
      %82 = sbr.rel (0) target = $region41
    $region40: #{tpu_custom_call.1} parent=1 // pred_region
      %83 = dma.done [#allocation6], 6144
    $region41: #{tpu_custom_call.1} parent=1 // pred_fallthru
      _
    // Predicated region
    $region42: #{tpu_custom_call.1} parent=1 // pred_check
      _
    $region43: #{tpu_custom_call.1} parent=1 // pred_check_branch
      %85 = sbr.rel (0) target = $region45
    $region44: #{tpu_custom_call.1} parent=1 // pred_region
      %86 = dma.done [#allocation6], 96
    $region45: #{tpu_custom_call.1} parent=1 // pred_fallthru
      _
    // Predicated region
    $region46: #{tpu_custom_call.1} parent=1 // pred_check
      _
    $region47: #{tpu_custom_call.1} parent=1 // pred_check_branch
      %88 = sbr.rel (0) target = $region49
    $region48: #{tpu_custom_call.1} parent=1 // pred_region
      %89 = dma.done [#allocation9], 18432
    $region49: #{tpu_custom_call.1} parent=1 // pred_fallthru
      _
    // Predicated region
    $region50: #{tpu_custom_call.1} parent=1 // pred_check
      _
    $region51: #{tpu_custom_call.1} parent=1 // pred_check_branch
      %91 = sbr.rel (0) target = $region53
    $region52: #{tpu_custom_call.1} parent=1 // pred_region
      %92 = dma.done [#allocation9], 96
    $region53: #{tpu_custom_call.1} parent=1 // pred_fallthru
      _
    %v94 = vld [vmem:[#allocation3] sm:$0xff]
    %v95 = vpack.c.bf16 %v94, %v94
    %v96 = vld [vmem:[#allocation5] sm:$0xff]
    %v97 = vld [vmem:[#allocation5 + $0x8] sm:$0xff]
    %v98 = vld [vmem:[#allocation5 + $0x10] sm:$0xff]
    %v99 = vld [vmem:[#allocation5 + $0x18] sm:$0xff]
    %v100 = vld [vmem:[#allocation5 + $0x20] sm:$0xff]
    %v101 = vld [vmem:[#allocation5 + $0x28] sm:$0xff]
    %v102 = vld [vmem:[#allocation5 + $0x30] sm:$0xff]
    %v103 = vld [vmem:[#allocation5 + $0x38] sm:$0xff]
    %v104 = vld [vmem:[#allocation5 + $0x40] sm:$0xff]
    %v105 = vld [vmem:[#allocation5 + $0x48] sm:$0xff]
    %v106 = vld [vmem:[#allocation5 + $0x50] sm:$0xff]
    %v107 = vld [vmem:[#allocation5 + $0x58] sm:$0xff]
    %v108 = vld [vmem:[#allocation5 + $0x60] sm:$0xff]
    %v109 = vld [vmem:[#allocation5 + $0x68] sm:$0xff]
    %v110 = vld [vmem:[#allocation5 + $0x70] sm:$0xff]
    %v111 = vld [vmem:[#allocation5 + $0x78] sm:$0xff]
    %v112 = vld [vmem:[#allocation5 + $0x80] sm:$0xff]
    %v113 = vld [vmem:[#allocation5 + $0x88] sm:$0xff]
    %v114 = vld [vmem:[#allocation5 + $0x90] sm:$0xff]
    %v115 = vld [vmem:[#allocation5 + $0x98] sm:$0xff]
    %v116 = vld [vmem:[#allocation5 + $0xa0] sm:$0xff]
    %v117 = vld [vmem:[#allocation5 + $0xa8] sm:$0xff]
    %v118 = vld [vmem:[#allocation5 + $0xb0] sm:$0xff]
    %v119 = vld [vmem:[#allocation5 + $0xb8] sm:$0xff]
    %v120 = vld [vmem:[#allocation5 + $0xc0] sm:$0xff]
    %v121 = vld [vmem:[#allocation5 + $0xc8] sm:$0xff]
    %v122 = vld [vmem:[#allocation5 + $0xd0] sm:$0xff]
    %v123 = vld [vmem:[#allocation5 + $0xd8] sm:$0xff]
    %v124 = vld [vmem:[#allocation5 + $0xe0] sm:$0xff]
    %v125 = vld [vmem:[#allocation5 + $0xe8] sm:$0xff]
    %v126 = vld [vmem:[#allocation5 + $0xf0] sm:$0xff]
    %v127 = vld [vmem:[#allocation5 + $0xf8] sm:$0xff]
    %v128 = vld [vmem:[#allocation5 + $0x100] sm:$0xff]
    %v129 = vld [vmem:[#allocation5 + $0x108] sm:$0xff]
    %v130 = vld [vmem:[#allocation5 + $0x110] sm:$0xff]
    %v131 = vld [vmem:[#allocation5 + $0x118] sm:$0xff]
    %v132 = vld [vmem:[#allocation5 + $0x120] sm:$0xff]
    %v133 = vld [vmem:[#allocation5 + $0x128] sm:$0xff]
    %v134 = vld [vmem:[#allocation5 + $0x130] sm:$0xff]
    %v135 = vld [vmem:[#allocation5 + $0x138] sm:$0xff]
    %v136 = vld [vmem:[#allocation5 + $0x140] sm:$0xff]
    %v137 = vld [vmem:[#allocation5 + $0x148] sm:$0xff]
    %v138 = vld [vmem:[#allocation5 + $0x150] sm:$0xff]
    %v139 = vld [vmem:[#allocation5 + $0x158] sm:$0xff]
    %v140 = vld [vmem:[#allocation5 + $0x160] sm:$0xff]
    %v141 = vld [vmem:[#allocation5 + $0x168] sm:$0xff]
    %v142 = vld [vmem:[#allocation5 + $0x170] sm:$0xff]
    %v143 = vld [vmem:[#allocation5 + $0x178] sm:$0xff]
    %v144 = vld [vmem:[#allocation7] sm:$0x3f]
    %v146 = vlaneseq
    %v147 = vshrl.u32 %v146, 7
    %v148 = vsub.s32 0, %v147
    %v149 = vrot.slane %v144, %v148
    %v150 = vlaneseq
    %v151 = vshrl.u32 %v150, 7
    %v152 = vsub.s32 1, %v151
    %v153 = vrot.slane %v144, %v152
    %v154 = vlaneseq
    %v155 = vshrl.u32 %v154, 7
    %v156 = vsub.s32 2, %v155
    %v157 = vrot.slane %v144, %v156
    %v158 = vlaneseq
    %v159 = vshrl.u32 %v158, 7
    %v160 = vsub.s32 3, %v159
    %v161 = vrot.slane %v144, %v160
    %v162 = vlaneseq
    %v163 = vshrl.u32 %v162, 7
    %v164 = vsub.s32 4, %v163
    %v165 = vrot.slane %v144, %v164
    %v166 = vlaneseq
    %v167 = vshrl.u32 %v166, 7
    %v168 = vsub.s32 5, %v167
    %v169 = vrot.slane %v144, %v168
    %v224 = vunpack.c.l.b16 %v96
    %v225 = vunpack.c.h.b16 %v96
    %v226 = vunpack.c.l.b16 %v97
    %v227 = vunpack.c.h.b16 %v97
    %v228 = vunpack.c.l.b16 %v98
    %v229 = vunpack.c.h.b16 %v98
    %v230 = vunpack.c.l.b16 %v99
    %v231 = vunpack.c.h.b16 %v99
    %v232 = vunpack.c.l.b16 %v100
    %v233 = vunpack.c.h.b16 %v100
    %v234 = vunpack.c.l.b16 %v101
    %v235 = vunpack.c.h.b16 %v101
    %v236 = vunpack.c.l.b16 %v102
    %v237 = vunpack.c.h.b16 %v102
    %v238 = vunpack.c.l.b16 %v103
    %v239 = vunpack.c.h.b16 %v103
    %v240 = vunpack.c.l.b16 %v104
    %v241 = vunpack.c.h.b16 %v104
    %v242 = vunpack.c.l.b16 %v105
    %v243 = vunpack.c.h.b16 %v105
    %v244 = vunpack.c.l.b16 %v106
    %v245 = vunpack.c.h.b16 %v106
    %v246 = vunpack.c.l.b16 %v107
    %v247 = vunpack.c.h.b16 %v107
    %v248 = vunpack.c.l.b16 %v108
    %v249 = vunpack.c.h.b16 %v108
    %v250 = vunpack.c.l.b16 %v109
    %v251 = vunpack.c.h.b16 %v109
    %v252 = vunpack.c.l.b16 %v110
    %v253 = vunpack.c.h.b16 %v110
    %v254 = vunpack.c.l.b16 %v111
    %v255 = vunpack.c.h.b16 %v111
    %v256 = vunpack.c.l.b16 %v112
    %v257 = vunpack.c.h.b16 %v112
    %v258 = vunpack.c.l.b16 %v113
    %v259 = vunpack.c.h.b16 %v113
    %v260 = vunpack.c.l.b16 %v114
    %v261 = vunpack.c.h.b16 %v114
    %v262 = vunpack.c.l.b16 %v115
    %v263 = vunpack.c.h.b16 %v115
    %v264 = vunpack.c.l.b16 %v116
    %v265 = vunpack.c.h.b16 %v116
    %v266 = vunpack.c.l.b16 %v117
    %v267 = vunpack.c.h.b16 %v117
    %v268 = vunpack.c.l.b16 %v118
    %v269 = vunpack.c.h.b16 %v118
    %v270 = vunpack.c.l.b16 %v119
    %v271 = vunpack.c.h.b16 %v119
    %v272 = vunpack.c.l.b16 %v120
    %v273 = vunpack.c.h.b16 %v120
    %v274 = vunpack.c.l.b16 %v121
    %v275 = vunpack.c.h.b16 %v121
    %v276 = vunpack.c.l.b16 %v122
    %v277 = vunpack.c.h.b16 %v122
    %v278 = vunpack.c.l.b16 %v123
    %v279 = vunpack.c.h.b16 %v123
    %v280 = vunpack.c.l.b16 %v124
    %v281 = vunpack.c.h.b16 %v124
    %v282 = vunpack.c.l.b16 %v125
    %v283 = vunpack.c.h.b16 %v125
    %v284 = vunpack.c.l.b16 %v126
    %v285 = vunpack.c.h.b16 %v126
    %v286 = vunpack.c.l.b16 %v127
    %v287 = vunpack.c.h.b16 %v127
    %v288 = vunpack.c.l.b16 %v128
    %v289 = vunpack.c.h.b16 %v128
    %v290 = vunpack.c.l.b16 %v129
    %v291 = vunpack.c.h.b16 %v129
    %v292 = vunpack.c.l.b16 %v130
    %v293 = vunpack.c.h.b16 %v130
    %v294 = vunpack.c.l.b16 %v131
    %v295 = vunpack.c.h.b16 %v131
    %v296 = vunpack.c.l.b16 %v132
    %v297 = vunpack.c.h.b16 %v132
    %v298 = vunpack.c.l.b16 %v133
    %v299 = vunpack.c.h.b16 %v133
    %v300 = vunpack.c.l.b16 %v134
    %v301 = vunpack.c.h.b16 %v134
    %v302 = vunpack.c.l.b16 %v135
    %v303 = vunpack.c.h.b16 %v135
    %v304 = vunpack.c.l.b16 %v136
    %v305 = vunpack.c.h.b16 %v136
    %v306 = vunpack.c.l.b16 %v137
    %v307 = vunpack.c.h.b16 %v137
    %v308 = vunpack.c.l.b16 %v138
    %v309 = vunpack.c.h.b16 %v138
    %v310 = vunpack.c.l.b16 %v139
    %v311 = vunpack.c.h.b16 %v139
    %v312 = vunpack.c.l.b16 %v140
    %v313 = vunpack.c.h.b16 %v140
    %v314 = vunpack.c.l.b16 %v141
    %v315 = vunpack.c.h.b16 %v141
    %v316 = vunpack.c.l.b16 %v142
    %v317 = vunpack.c.h.b16 %v142
    %v318 = vunpack.c.l.b16 %v143
    %v319 = vunpack.c.h.b16 %v143
    %v320 = vpack.c.b16 %v230, %v224
    %v321 = vpack.c.b16 %v231, %v225
    %v322 = vpack.c.b16 %v232, %v226
    %v323 = vpack.c.b16 %v233, %v227
    %v324 = vpack.c.b16 %v234, %v228
    %v325 = vpack.c.b16 %v235, %v229
    %v326 = vpack.c.b16 %v242, %v236
    %v327 = vpack.c.b16 %v243, %v237
    %v328 = vpack.c.b16 %v244, %v238
    %v329 = vpack.c.b16 %v245, %v239
    %v330 = vpack.c.b16 %v246, %v240
    %v331 = vpack.c.b16 %v247, %v241
    %v332 = vpack.c.b16 %v254, %v248
    %v333 = vpack.c.b16 %v255, %v249
    %v334 = vpack.c.b16 %v256, %v250
    %v335 = vpack.c.b16 %v257, %v251
    %v336 = vpack.c.b16 %v258, %v252
    %v337 = vpack.c.b16 %v259, %v253
    %v338 = vpack.c.b16 %v266, %v260
    %v339 = vpack.c.b16 %v267, %v261
    %v340 = vpack.c.b16 %v268, %v262
    %v341 = vpack.c.b16 %v269, %v263
    %v342 = vpack.c.b16 %v270, %v264
    %v343 = vpack.c.b16 %v271, %v265
    %v344 = vpack.c.b16 %v278, %v272
    %v345 = vpack.c.b16 %v279, %v273
    %v346 = vpack.c.b16 %v280, %v274
    %v347 = vpack.c.b16 %v281, %v275
    %v348 = vpack.c.b16 %v282, %v276
    %v349 = vpack.c.b16 %v283, %v277
    %v350 = vpack.c.b16 %v290, %v284
    %v351 = vpack.c.b16 %v291, %v285
    %v352 = vpack.c.b16 %v292, %v286
    %v353 = vpack.c.b16 %v293, %v287
    %v354 = vpack.c.b16 %v294, %v288
    %v355 = vpack.c.b16 %v295, %v289
    %v356 = vpack.c.b16 %v302, %v296
    %v357 = vpack.c.b16 %v303, %v297
    %v358 = vpack.c.b16 %v304, %v298
    %v359 = vpack.c.b16 %v305, %v299
    %v360 = vpack.c.b16 %v306, %v300
    %v361 = vpack.c.b16 %v307, %v301
    %v362 = vpack.c.b16 %v314, %v308
    %v363 = vpack.c.b16 %v315, %v309
    %v364 = vpack.c.b16 %v316, %v310
    %v365 = vpack.c.b16 %v317, %v311
    %v366 = vpack.c.b16 %v318, %v312
    %v367 = vpack.c.b16 %v319, %v313
    %416 = vmatprep.subr.bf16.mxu0 %v363
    %417 = vmatpush1.bf16.msra.mxu0 %v362
    %418 = vmatprep.subr.bf16.mxu0 %v357
    %419 = vmatpush1.bf16.msra.mxu0 %v356
    %420 = vmatprep.subr.bf16.mxu0 %v351
    %421 = vmatpush1.bf16.msra.mxu0 %v350
    %422 = vmatprep.subr.bf16.mxu0 %v345
    %423 = vmatpush1.bf16.msra.mxu0 %v344
    %424 = vmatprep.subr.bf16.mxu0 %v339
    %425 = vmatpush1.bf16.msra.mxu0 %v338
    %426 = vmatprep.subr.bf16.mxu0 %v333
    %427 = vmatpush1.bf16.msra.mxu0 %v332
    %428 = vmatprep.subr.bf16.mxu0 %v327
    %429 = vmatpush1.bf16.msra.mxu0 %v326
    %430 = vmatprep.subr.bf16.mxu0 %v321
    %431 = vmatpush1.bf16.msra.mxu0 %v320
    %432 = vmatprep.subr.bf16.mxu0 0
    %433 = vmatpush2.bf16.msra.mxu0 0
    %434 = vmatprep.subr.bf16.mxu0 0
    %435 = vmatpush2.bf16.msra.mxu0 0
    %436 = vmatprep.subr.bf16.mxu0 0
    %437 = vmatpush2.bf16.msra.mxu0 0
    %438 = vmatprep.subr.bf16.mxu0 0
    %439 = vmatpush2.bf16.msra.mxu0 0
    %440 = vmatprep.subr.bf16.mxu0 0
    %441 = vmatpush2.bf16.msra.mxu0 0
    %442 = vmatprep.subr.bf16.mxu0 0
    %443 = vmatpush2.bf16.msra.mxu0 0
    %444 = vmatprep.subr.bf16.mxu0 0
    %445 = vmatpush2.bf16.msra.mxu0 0
    %446 = vmatprep.subr.bf16.mxu0 0
    %447 = vmatpush2.bf16.msra.mxu0 0
    %448 = vmatprep.mubr.bf16.mxu0 0
    %449 = vmatmul.mubr.bf16.gmra.mxu0 %v95
    %v450 = vpop.f32.mrf.mxu0
    %v451 = vadd.f32 %v149, %v450
    %v452 = vpop.f32.mrf.mxu0
    %v453 = vadd.f32 %v153, %v452
    %v454 = vpop.f32.mrf.mxu0
    %v455 = vpop.f32.mrf.mxu0
    %456 = vdwg.mxu0
    %457 = vmatprep.subr.bf16.mxu0 %v365
    %458 = vmatpush1.bf16.msra.mxu0 %v364
    %459 = vmatprep.subr.bf16.mxu0 %v359
    %460 = vmatpush1.bf16.msra.mxu0 %v358
    %461 = vmatprep.subr.bf16.mxu0 %v353
    %462 = vmatpush1.bf16.msra.mxu0 %v352
    %463 = vmatprep.subr.bf16.mxu0 %v347
    %464 = vmatpush1.bf16.msra.mxu0 %v346
    %465 = vmatprep.subr.bf16.mxu0 %v341
    %466 = vmatpush1.bf16.msra.mxu0 %v340
    %467 = vmatprep.subr.bf16.mxu0 %v335
    %468 = vmatpush1.bf16.msra.mxu0 %v334
    %469 = vmatprep.subr.bf16.mxu0 %v329
    %470 = vmatpush1.bf16.msra.mxu0 %v328
    %471 = vmatprep.subr.bf16.mxu0 %v323
    %472 = vmatpush1.bf16.msra.mxu0 %v322
    %473 = vmatprep.subr.bf16.mxu0 0
    %474 = vmatpush2.bf16.msra.mxu0 0
    %475 = vmatprep.subr.bf16.mxu0 0
    %476 = vmatpush2.bf16.msra.mxu0 0
    %477 = vmatprep.subr.bf16.mxu0 0
    %478 = vmatpush2.bf16.msra.mxu0 0
    %479 = vmatprep.subr.bf16.mxu0 0
    %480 = vmatpush2.bf16.msra.mxu0 0
    %481 = vmatprep.subr.bf16.mxu0 0
    %482 = vmatpush2.bf16.msra.mxu0 0
    %483 = vmatprep.subr.bf16.mxu0 0
    %484 = vmatpush2.bf16.msra.mxu0 0
    %485 = vmatprep.subr.bf16.mxu0 0
    %486 = vmatpush2.bf16.msra.mxu0 0
    %487 = vmatprep.subr.bf16.mxu0 0
    %488 = vmatpush2.bf16.msra.mxu0 0
    %489 = vmatprep.mubr.bf16.mxu0 0
    %490 = vmatmul.mubr.bf16.gmra.mxu0 %v95
    %v491 = vpop.f32.mrf.mxu0
    %v492 = vadd.f32 %v157, %v491
    %v493 = vpop.f32.mrf.mxu0
    %v494 = vadd.f32 %v161, %v493
    %v495 = vpop.f32.mrf.mxu0
    %v496 = vpop.f32.mrf.mxu0
    %497 = vdwg.mxu0
    %498 = vmatprep.subr.bf16.mxu0 %v367
    %499 = vmatpush1.bf16.msra.mxu0 %v366
    %500 = vmatprep.subr.bf16.mxu0 %v361
    %501 = vmatpush1.bf16.msra.mxu0 %v360
    %502 = vmatprep.subr.bf16.mxu0 %v355
    %503 = vmatpush1.bf16.msra.mxu0 %v354
    %504 = vmatprep.subr.bf16.mxu0 %v349
    %505 = vmatpush1.bf16.msra.mxu0 %v348
    %506 = vmatprep.subr.bf16.mxu0 %v343
    %507 = vmatpush1.bf16.msra.mxu0 %v342
    %508 = vmatprep.subr.bf16.mxu0 %v337
    %509 = vmatpush1.bf16.msra.mxu0 %v336
    %510 = vmatprep.subr.bf16.mxu0 %v331
    %511 = vmatpush1.bf16.msra.mxu0 %v330
    %512 = vmatprep.subr.bf16.mxu0 %v325
    %513 = vmatpush1.bf16.msra.mxu0 %v324
    %514 = vmatprep.subr.bf16.mxu0 0
    %515 = vmatpush2.bf16.msra.mxu0 0
    %516 = vmatprep.subr.bf16.mxu0 0
    %517 = vmatpush2.bf16.msra.mxu0 0
    %518 = vmatprep.subr.bf16.mxu0 0
    %519 = vmatpush2.bf16.msra.mxu0 0
    %520 = vmatprep.subr.bf16.mxu0 0
    %521 = vmatpush2.bf16.msra.mxu0 0
    %522 = vmatprep.subr.bf16.mxu0 0
    %523 = vmatpush2.bf16.msra.mxu0 0
    %524 = vmatprep.subr.bf16.mxu0 0
    %525 = vmatpush2.bf16.msra.mxu0 0
    %526 = vmatprep.subr.bf16.mxu0 0
    %527 = vmatpush2.bf16.msra.mxu0 0
    %528 = vmatprep.subr.bf16.mxu0 0
    %529 = vmatpush2.bf16.msra.mxu0 0
    %530 = vmatprep.mubr.bf16.mxu0 0
    %531 = vmatmul.mubr.bf16.gmra.mxu0 %v95
    %v532 = vpop.f32.mrf.mxu0
    %v533 = vadd.f32 %v165, %v532
    %v534 = vpop.f32.mrf.mxu0
    %v535 = vadd.f32 %v169, %v534
    %v536 = vpop.f32.mrf.mxu0
    %v537 = vpop.f32.mrf.mxu0
    %538 = vdwg.mxu0
    %vm539 = vcmp.gt.f32.partialorder %v451, 0.0
    %vm540 = vcmp.gt.f32.partialorder %v453, 0.0
    %vm541 = vcmp.gt.f32.partialorder %v492, 0.0
    %vm542 = vcmp.gt.f32.partialorder %v494, 0.0
    %vm543 = vcmp.gt.f32.partialorder %v533, 0.0
    %vm544 = vcmp.gt.f32.partialorder %v535, 0.0
    %v545 = vmul.f32 %v451, 0.2
    %v546 = vmul.f32 %v453, 0.2
    %v547 = vmul.f32 %v492, 0.2
    %v548 = vmul.f32 %v494, 0.2
    %v549 = vmul.f32 %v533, 0.2
    %v550 = vmul.f32 %v535, 0.2
    %v551 = vsel %vm539, %v451, %v545
    %v552 = vsel %vm540, %v453, %v546
    %v553 = vsel %vm541, %v492, %v547
    %v554 = vsel %vm542, %v494, %v548
    %v555 = vsel %vm543, %v533, %v549
    %v556 = vsel %vm544, %v535, %v550
    %v557 = vld [vmem:[#allocation8] sm:$0xff]
    %v558 = vld [vmem:[#allocation8 + $0x8] sm:$0xff]
    %v559 = vld [vmem:[#allocation8 + $0x10] sm:$0xff]
    %v560 = vld [vmem:[#allocation8 + $0x18] sm:$0xff]
    %v561 = vld [vmem:[#allocation8 + $0x20] sm:$0xff]
    %v562 = vld [vmem:[#allocation8 + $0x28] sm:$0xff]
    %v563 = vld [vmem:[#allocation8 + $0x30] sm:$0xff]
    %v564 = vld [vmem:[#allocation8 + $0x38] sm:$0xff]
    %v565 = vld [vmem:[#allocation8 + $0x40] sm:$0xff]
    %v566 = vld [vmem:[#allocation8 + $0x48] sm:$0xff]
    %v567 = vld [vmem:[#allocation8 + $0x50] sm:$0xff]
    %v568 = vld [vmem:[#allocation8 + $0x58] sm:$0xff]
    %v569 = vld [vmem:[#allocation8 + $0x60] sm:$0xff]
    %v570 = vld [vmem:[#allocation8 + $0x68] sm:$0xff]
    %v571 = vld [vmem:[#allocation8 + $0x70] sm:$0xff]
    %v572 = vld [vmem:[#allocation8 + $0x78] sm:$0xff]
    %v573 = vld [vmem:[#allocation8 + $0x80] sm:$0xff]
    %v574 = vld [vmem:[#allocation8 + $0x88] sm:$0xff]
    %v575 = vld [vmem:[#allocation8 + $0x90] sm:$0xff]
    %v576 = vld [vmem:[#allocation8 + $0x98] sm:$0xff]
    %v577 = vld [vmem:[#allocation8 + $0xa0] sm:$0xff]
    %v578 = vld [vmem:[#allocation8 + $0xa8] sm:$0xff]
    %v579 = vld [vmem:[#allocation8 + $0xb0] sm:$0xff]
    %v580 = vld [vmem:[#allocation8 + $0xb8] sm:$0xff]
    %v581 = vld [vmem:[#allocation8 + $0xc0] sm:$0xff]
    %v582 = vld [vmem:[#allocation8 + $0xc8] sm:$0xff]
    %v583 = vld [vmem:[#allocation8 + $0xd0] sm:$0xff]
    %v584 = vld [vmem:[#allocation8 + $0xd8] sm:$0xff]
    %v585 = vld [vmem:[#allocation8 + $0xe0] sm:$0xff]
    %v586 = vld [vmem:[#allocation8 + $0xe8] sm:$0xff]
    %v587 = vld [vmem:[#allocation8 + $0xf0] sm:$0xff]
    %v588 = vld [vmem:[#allocation8 + $0xf8] sm:$0xff]
    %v589 = vld [vmem:[#allocation8 + $0x100] sm:$0xff]
    %v590 = vld [vmem:[#allocation8 + $0x108] sm:$0xff]
    %v591 = vld [vmem:[#allocation8 + $0x110] sm:$0xff]
    %v592 = vld [vmem:[#allocation8 + $0x118] sm:$0xff]
    %v593 = vld [vmem:[#allocation8 + $0x120] sm:$0xff]
    %v594 = vld [vmem:[#allocation8 + $0x128] sm:$0xff]
    %v595 = vld [vmem:[#allocation8 + $0x130] sm:$0xff]
    %v596 = vld [vmem:[#allocation8 + $0x138] sm:$0xff]
    %v597 = vld [vmem:[#allocation8 + $0x140] sm:$0xff]
    %v598 = vld [vmem:[#allocation8 + $0x148] sm:$0xff]
    %v599 = vld [vmem:[#allocation8 + $0x150] sm:$0xff]
    %v600 = vld [vmem:[#allocation8 + $0x158] sm:$0xff]
    %v601 = vld [vmem:[#allocation8 + $0x160] sm:$0xff]
    %v602 = vld [vmem:[#allocation8 + $0x168] sm:$0xff]
    %v603 = vld [vmem:[#allocation8 + $0x170] sm:$0xff]
    %v604 = vld [vmem:[#allocation8 + $0x178] sm:$0xff]
    %v605 = vld [vmem:[#allocation8 + $0x180] sm:$0xff]
    %v606 = vld [vmem:[#allocation8 + $0x188] sm:$0xff]
    %v607 = vld [vmem:[#allocation8 + $0x190] sm:$0xff]
    %v608 = vld [vmem:[#allocation8 + $0x198] sm:$0xff]
    %v609 = vld [vmem:[#allocation8 + $0x1a0] sm:$0xff]
    %v610 = vld [vmem:[#allocation8 + $0x1a8] sm:$0xff]
    %v611 = vld [vmem:[#allocation8 + $0x1b0] sm:$0xff]
    %v612 = vld [vmem:[#allocation8 + $0x1b8] sm:$0xff]
    %v613 = vld [vmem:[#allocation8 + $0x1c0] sm:$0xff]
    %v614 = vld [vmem:[#allocation8 + $0x1c8] sm:$0xff]
    %v615 = vld [vmem:[#allocation8 + $0x1d0] sm:$0xff]
    %v616 = vld [vmem:[#allocation8 + $0x1d8] sm:$0xff]
    %v617 = vld [vmem:[#allocation8 + $0x1e0] sm:$0xff]
    %v618 = vld [vmem:[#allocation8 + $0x1e8] sm:$0xff]
    %v619 = vld [vmem:[#allocation8 + $0x1f0] sm:$0xff]
    %v620 = vld [vmem:[#allocation8 + $0x1f8] sm:$0xff]
    %v621 = vld [vmem:[#allocation8 + $0x200] sm:$0xff]
    %v622 = vld [vmem:[#allocation8 + $0x208] sm:$0xff]
    %v623 = vld [vmem:[#allocation8 + $0x210] sm:$0xff]
    %v624 = vld [vmem:[#allocation8 + $0x218] sm:$0xff]
    %v625 = vld [vmem:[#allocation8 + $0x220] sm:$0xff]
    %v626 = vld [vmem:[#allocation8 + $0x228] sm:$0xff]
    %v627 = vld [vmem:[#allocation8 + $0x230] sm:$0xff]
    %v628 = vld [vmem:[#allocation8 + $0x238] sm:$0xff]
    %v629 = vld [vmem:[#allocation8 + $0x240] sm:$0xff]
    %v630 = vld [vmem:[#allocation8 + $0x248] sm:$0xff]
    %v631 = vld [vmem:[#allocation8 + $0x250] sm:$0xff]
    %v632 = vld [vmem:[#allocation8 + $0x258] sm:$0xff]
    %v633 = vld [vmem:[#allocation8 + $0x260] sm:$0xff]
    %v634 = vld [vmem:[#allocation8 + $0x268] sm:$0xff]
    %v635 = vld [vmem:[#allocation8 + $0x270] sm:$0xff]
    %v636 = vld [vmem:[#allocation8 + $0x278] sm:$0xff]
    %v637 = vld [vmem:[#allocation8 + $0x280] sm:$0xff]
    %v638 = vld [vmem:[#allocation8 + $0x288] sm:$0xff]
    %v639 = vld [vmem:[#allocation8 + $0x290] sm:$0xff]
    %v640 = vld [vmem:[#allocation8 + $0x298] sm:$0xff]
    %v641 = vld [vmem:[#allocation8 + $0x2a0] sm:$0xff]
    %v642 = vld [vmem:[#allocation8 + $0x2a8] sm:$0xff]
    %v643 = vld [vmem:[#allocation8 + $0x2b0] sm:$0xff]
    %v644 = vld [vmem:[#allocation8 + $0x2b8] sm:$0xff]
    %v645 = vld [vmem:[#allocation8 + $0x2c0] sm:$0xff]
    %v646 = vld [vmem:[#allocation8 + $0x2c8] sm:$0xff]
    %v647 = vld [vmem:[#allocation8 + $0x2d0] sm:$0xff]
    %v648 = vld [vmem:[#allocation8 + $0x2d8] sm:$0xff]
    %v649 = vld [vmem:[#allocation8 + $0x2e0] sm:$0xff]
    %v650 = vld [vmem:[#allocation8 + $0x2e8] sm:$0xff]
    %v651 = vld [vmem:[#allocation8 + $0x2f0] sm:$0xff]
    %v652 = vld [vmem:[#allocation8 + $0x2f8] sm:$0xff]
    %v653 = vld [vmem:[#allocation8 + $0x300] sm:$0xff]
    %v654 = vld [vmem:[#allocation8 + $0x308] sm:$0xff]
    %v655 = vld [vmem:[#allocation8 + $0x310] sm:$0xff]
    %v656 = vld [vmem:[#allocation8 + $0x318] sm:$0xff]
    %v657 = vld [vmem:[#allocation8 + $0x320] sm:$0xff]
    %v658 = vld [vmem:[#allocation8 + $0x328] sm:$0xff]
    %v659 = vld [vmem:[#allocation8 + $0x330] sm:$0xff]
    %v660 = vld [vmem:[#allocation8 + $0x338] sm:$0xff]
    %v661 = vld [vmem:[#allocation8 + $0x340] sm:$0xff]
    %v662 = vld [vmem:[#allocation8 + $0x348] sm:$0xff]
    %v663 = vld [vmem:[#allocation8 + $0x350] sm:$0xff]
    %v664 = vld [vmem:[#allocation8 + $0x358] sm:$0xff]
    %v665 = vld [vmem:[#allocation8 + $0x360] sm:$0xff]
    %v666 = vld [vmem:[#allocation8 + $0x368] sm:$0xff]
    %v667 = vld [vmem:[#allocation8 + $0x370] sm:$0xff]
    %v668 = vld [vmem:[#allocation8 + $0x378] sm:$0xff]
    %v669 = vld [vmem:[#allocation8 + $0x380] sm:$0xff]
    %v670 = vld [vmem:[#allocation8 + $0x388] sm:$0xff]
    %v671 = vld [vmem:[#allocation8 + $0x390] sm:$0xff]
    %v672 = vld [vmem:[#allocation8 + $0x398] sm:$0xff]
    %v673 = vld [vmem:[#allocation8 + $0x3a0] sm:$0xff]
    %v674 = vld [vmem:[#allocation8 + $0x3a8] sm:$0xff]
    %v675 = vld [vmem:[#allocation8 + $0x3b0] sm:$0xff]
    %v676 = vld [vmem:[#allocation8 + $0x3b8] sm:$0xff]
    %v677 = vld [vmem:[#allocation8 + $0x3c0] sm:$0xff]
    %v678 = vld [vmem:[#allocation8 + $0x3c8] sm:$0xff]
    %v679 = vld [vmem:[#allocation8 + $0x3d0] sm:$0xff]
    %v680 = vld [vmem:[#allocation8 + $0x3d8] sm:$0xff]
    %v681 = vld [vmem:[#allocation8 + $0x3e0] sm:$0xff]
    %v682 = vld [vmem:[#allocation8 + $0x3e8] sm:$0xff]
    %v683 = vld [vmem:[#allocation8 + $0x3f0] sm:$0xff]
    %v684 = vld [vmem:[#allocation8 + $0x3f8] sm:$0xff]
    %v685 = vld [vmem:[#allocation8 + $0x400] sm:$0xff]
    %v686 = vld [vmem:[#allocation8 + $0x408] sm:$0xff]
    %v687 = vld [vmem:[#allocation8 + $0x410] sm:$0xff]
    %v688 = vld [vmem:[#allocation8 + $0x418] sm:$0xff]
    %v689 = vld [vmem:[#allocation8 + $0x420] sm:$0xff]
    %v690 = vld [vmem:[#allocation8 + $0x428] sm:$0xff]
    %v691 = vld [vmem:[#allocation8 + $0x430] sm:$0xff]
    %v692 = vld [vmem:[#allocation8 + $0x438] sm:$0xff]
    %v693 = vld [vmem:[#allocation8 + $0x440] sm:$0xff]
    %v694 = vld [vmem:[#allocation8 + $0x448] sm:$0xff]
    %v695 = vld [vmem:[#allocation8 + $0x450] sm:$0xff]
    %v696 = vld [vmem:[#allocation8 + $0x458] sm:$0xff]
    %v697 = vld [vmem:[#allocation8 + $0x460] sm:$0xff]
    %v698 = vld [vmem:[#allocation8 + $0x468] sm:$0xff]
    %v699 = vld [vmem:[#allocation8 + $0x470] sm:$0xff]
    %v700 = vld [vmem:[#allocation8 + $0x478] sm:$0xff]
    %v701 = vunpack.c.l.s8.bf16 %v557
    %v702 = vunpack.c.l.s8.bf16 %v558
    %v703 = vunpack.c.l.s8.bf16 %v559
    %v704 = vunpack.c.l.s8.bf16 %v560
    %v705 = vunpack.c.l.s8.bf16 %v561
    %v706 = vunpack.c.l.s8.bf16 %v562
    %v707 = vunpack.c.h.s8.bf16 %v557
    %v708 = vunpack.c.h.s8.bf16 %v558
    %v709 = vunpack.c.h.s8.bf16 %v559
    %v710 = vunpack.c.h.s8.bf16 %v560
    %v711 = vunpack.c.h.s8.bf16 %v561
    %v712 = vunpack.c.h.s8.bf16 %v562
    %v713 = vunpack.c.l.s8.bf16 %v563
    %v714 = vunpack.c.l.s8.bf16 %v564
    %v715 = vunpack.c.l.s8.bf16 %v565
    %v716 = vunpack.c.l.s8.bf16 %v566
    %v717 = vunpack.c.l.s8.bf16 %v567
    %v718 = vunpack.c.l.s8.bf16 %v568
    %v719 = vunpack.c.h.s8.bf16 %v563
    %v720 = vunpack.c.h.s8.bf16 %v564
    %v721 = vunpack.c.h.s8.bf16 %v565
    %v722 = vunpack.c.h.s8.bf16 %v566
    %v723 = vunpack.c.h.s8.bf16 %v567
    %v724 = vunpack.c.h.s8.bf16 %v568
    %v725 = vunpack.c.l.s8.bf16 %v569
    %v726 = vunpack.c.l.s8.bf16 %v570
    %v727 = vunpack.c.l.s8.bf16 %v571
    %v728 = vunpack.c.l.s8.bf16 %v572
    %v729 = vunpack.c.l.s8.bf16 %v573
    %v730 = vunpack.c.l.s8.bf16 %v574
    %v731 = vunpack.c.h.s8.bf16 %v569
    %v732 = vunpack.c.h.s8.bf16 %v570
    %v733 = vunpack.c.h.s8.bf16 %v571
    %v734 = vunpack.c.h.s8.bf16 %v572
    %v735 = vunpack.c.h.s8.bf16 %v573
    %v736 = vunpack.c.h.s8.bf16 %v574
    %v737 = vunpack.c.l.s8.bf16 %v575
    %v738 = vunpack.c.l.s8.bf16 %v576
    %v739 = vunpack.c.l.s8.bf16 %v577
    %v740 = vunpack.c.l.s8.bf16 %v578
    %v741 = vunpack.c.l.s8.bf16 %v579
    %v742 = vunpack.c.l.s8.bf16 %v580
    %v743 = vunpack.c.h.s8.bf16 %v575
    %v744 = vunpack.c.h.s8.bf16 %v576
    %v745 = vunpack.c.h.s8.bf16 %v577
    %v746 = vunpack.c.h.s8.bf16 %v578
    %v747 = vunpack.c.h.s8.bf16 %v579
    %v748 = vunpack.c.h.s8.bf16 %v580
    %v749 = vunpack.c.l.s8.bf16 %v581
    %v750 = vunpack.c.l.s8.bf16 %v582
    %v751 = vunpack.c.l.s8.bf16 %v583
    %v752 = vunpack.c.l.s8.bf16 %v584
    %v753 = vunpack.c.l.s8.bf16 %v585
    %v754 = vunpack.c.l.s8.bf16 %v586
    %v755 = vunpack.c.h.s8.bf16 %v581
    %v756 = vunpack.c.h.s8.bf16 %v582
    %v757 = vunpack.c.h.s8.bf16 %v583
    %v758 = vunpack.c.h.s8.bf16 %v584
    %v759 = vunpack.c.h.s8.bf16 %v585
    %v760 = vunpack.c.h.s8.bf16 %v586
    %v761 = vunpack.c.l.s8.bf16 %v587
    %v762 = vunpack.c.l.s8.bf16 %v588
    %v763 = vunpack.c.l.s8.bf16 %v589
    %v764 = vunpack.c.l.s8.bf16 %v590
    %v765 = vunpack.c.l.s8.bf16 %v591
    %v766 = vunpack.c.l.s8.bf16 %v592
    %v767 = vunpack.c.h.s8.bf16 %v587
    %v768 = vunpack.c.h.s8.bf16 %v588
    %v769 = vunpack.c.h.s8.bf16 %v589
    %v770 = vunpack.c.h.s8.bf16 %v590
    %v771 = vunpack.c.h.s8.bf16 %v591
    %v772 = vunpack.c.h.s8.bf16 %v592
    %v773 = vunpack.c.l.s8.bf16 %v593
    %v774 = vunpack.c.l.s8.bf16 %v594
    %v775 = vunpack.c.l.s8.bf16 %v595
    %v776 = vunpack.c.l.s8.bf16 %v596
    %v777 = vunpack.c.l.s8.bf16 %v597
    %v778 = vunpack.c.l.s8.bf16 %v598
    %v779 = vunpack.c.h.s8.bf16 %v593
    %v780 = vunpack.c.h.s8.bf16 %v594
    %v781 = vunpack.c.h.s8.bf16 %v595
    %v782 = vunpack.c.h.s8.bf16 %v596
    %v783 = vunpack.c.h.s8.bf16 %v597
    %v784 = vunpack.c.h.s8.bf16 %v598
    %v785 = vunpack.c.l.s8.bf16 %v599
    %v786 = vunpack.c.l.s8.bf16 %v600
    %v787 = vunpack.c.l.s8.bf16 %v601
    %v788 = vunpack.c.l.s8.bf16 %v602
    %v789 = vunpack.c.l.s8.bf16 %v603
    %v790 = vunpack.c.l.s8.bf16 %v604
    %v791 = vunpack.c.h.s8.bf16 %v599
    %v792 = vunpack.c.h.s8.bf16 %v600
    %v793 = vunpack.c.h.s8.bf16 %v601
    %v794 = vunpack.c.h.s8.bf16 %v602
    %v795 = vunpack.c.h.s8.bf16 %v603
    %v796 = vunpack.c.h.s8.bf16 %v604
    %v797 = vunpack.c.l.s8.bf16 %v605
    %v798 = vunpack.c.l.s8.bf16 %v606
    %v799 = vunpack.c.l.s8.bf16 %v607
    %v800 = vunpack.c.l.s8.bf16 %v608
    %v801 = vunpack.c.l.s8.bf16 %v609
    %v802 = vunpack.c.l.s8.bf16 %v610
    %v803 = vunpack.c.h.s8.bf16 %v605
    %v804 = vunpack.c.h.s8.bf16 %v606
    %v805 = vunpack.c.h.s8.bf16 %v607
    %v806 = vunpack.c.h.s8.bf16 %v608
    %v807 = vunpack.c.h.s8.bf16 %v609
    %v808 = vunpack.c.h.s8.bf16 %v610
    %v809 = vunpack.c.l.s8.bf16 %v611
    %v810 = vunpack.c.l.s8.bf16 %v612
    %v811 = vunpack.c.l.s8.bf16 %v613
    %v812 = vunpack.c.l.s8.bf16 %v614
    %v813 = vunpack.c.l.s8.bf16 %v615
    %v814 = vunpack.c.l.s8.bf16 %v616
    %v815 = vunpack.c.h.s8.bf16 %v611
    %v816 = vunpack.c.h.s8.bf16 %v612
    %v817 = vunpack.c.h.s8.bf16 %v613
    %v818 = vunpack.c.h.s8.bf16 %v614
    %v819 = vunpack.c.h.s8.bf16 %v615
    %v820 = vunpack.c.h.s8.bf16 %v616
    %v821 = vunpack.c.l.s8.bf16 %v617
    %v822 = vunpack.c.l.s8.bf16 %v618
    %v823 = vunpack.c.l.s8.bf16 %v619
    %v824 = vunpack.c.l.s8.bf16 %v620
    %v825 = vunpack.c.l.s8.bf16 %v621
    %v826 = vunpack.c.l.s8.bf16 %v622
    %v827 = vunpack.c.h.s8.bf16 %v617
    %v828 = vunpack.c.h.s8.bf16 %v618
    %v829 = vunpack.c.h.s8.bf16 %v619
    %v830 = vunpack.c.h.s8.bf16 %v620
    %v831 = vunpack.c.h.s8.bf16 %v621
    %v832 = vunpack.c.h.s8.bf16 %v622
    %v833 = vunpack.c.l.s8.bf16 %v623
    %v834 = vunpack.c.l.s8.bf16 %v624
    %v835 = vunpack.c.l.s8.bf16 %v625
    %v836 = vunpack.c.l.s8.bf16 %v626
    %v837 = vunpack.c.l.s8.bf16 %v627
    %v838 = vunpack.c.l.s8.bf16 %v628
    %v839 = vunpack.c.h.s8.bf16 %v623
    %v840 = vunpack.c.h.s8.bf16 %v624
    %v841 = vunpack.c.h.s8.bf16 %v625
    %v842 = vunpack.c.h.s8.bf16 %v626
    %v843 = vunpack.c.h.s8.bf16 %v627
    %v844 = vunpack.c.h.s8.bf16 %v628
    %v845 = vunpack.c.l.s8.bf16 %v629
    %v846 = vunpack.c.l.s8.bf16 %v630
    %v847 = vunpack.c.l.s8.bf16 %v631
    %v848 = vunpack.c.l.s8.bf16 %v632
    %v849 = vunpack.c.l.s8.bf16 %v633
    %v850 = vunpack.c.l.s8.bf16 %v634
    %v851 = vunpack.c.h.s8.bf16 %v629
    %v852 = vunpack.c.h.s8.bf16 %v630
    %v853 = vunpack.c.h.s8.bf16 %v631
    %v854 = vunpack.c.h.s8.bf16 %v632
    %v855 = vunpack.c.h.s8.bf16 %v633
    %v856 = vunpack.c.h.s8.bf16 %v634
    %v857 = vunpack.c.l.s8.bf16 %v635
    %v858 = vunpack.c.l.s8.bf16 %v636
    %v859 = vunpack.c.l.s8.bf16 %v637
    %v860 = vunpack.c.l.s8.bf16 %v638
    %v861 = vunpack.c.l.s8.bf16 %v639
    %v862 = vunpack.c.l.s8.bf16 %v640
    %v863 = vunpack.c.h.s8.bf16 %v635
    %v864 = vunpack.c.h.s8.bf16 %v636
    %v865 = vunpack.c.h.s8.bf16 %v637
    %v866 = vunpack.c.h.s8.bf16 %v638
    %v867 = vunpack.c.h.s8.bf16 %v639
    %v868 = vunpack.c.h.s8.bf16 %v640
    %v869 = vunpack.c.l.s8.bf16 %v641
    %v870 = vunpack.c.l.s8.bf16 %v642
    %v871 = vunpack.c.l.s8.bf16 %v643
    %v872 = vunpack.c.l.s8.bf16 %v644
    %v873 = vunpack.c.l.s8.bf16 %v645
    %v874 = vunpack.c.l.s8.bf16 %v646
    %v875 = vunpack.c.h.s8.bf16 %v641
    %v876 = vunpack.c.h.s8.bf16 %v642
    %v877 = vunpack.c.h.s8.bf16 %v643
    %v878 = vunpack.c.h.s8.bf16 %v644
    %v879 = vunpack.c.h.s8.bf16 %v645
    %v880 = vunpack.c.h.s8.bf16 %v646
    %v881 = vunpack.c.l.s8.bf16 %v647
    %v882 = vunpack.c.l.s8.bf16 %v648
    %v883 = vunpack.c.l.s8.bf16 %v649
    %v884 = vunpack.c.l.s8.bf16 %v650
    %v885 = vunpack.c.l.s8.bf16 %v651
    %v886 = vunpack.c.l.s8.bf16 %v652
    %v887 = vunpack.c.h.s8.bf16 %v647
    %v888 = vunpack.c.h.s8.bf16 %v648
    %v889 = vunpack.c.h.s8.bf16 %v649
    %v890 = vunpack.c.h.s8.bf16 %v650
    %v891 = vunpack.c.h.s8.bf16 %v651
    %v892 = vunpack.c.h.s8.bf16 %v652
    %v893 = vunpack.c.l.s8.bf16 %v653
    %v894 = vunpack.c.l.s8.bf16 %v654
    %v895 = vunpack.c.l.s8.bf16 %v655
    %v896 = vunpack.c.l.s8.bf16 %v656
    %v897 = vunpack.c.l.s8.bf16 %v657
    %v898 = vunpack.c.l.s8.bf16 %v658
    %v899 = vunpack.c.h.s8.bf16 %v653
    %v900 = vunpack.c.h.s8.bf16 %v654
    %v901 = vunpack.c.h.s8.bf16 %v655
    %v902 = vunpack.c.h.s8.bf16 %v656
    %v903 = vunpack.c.h.s8.bf16 %v657
    %v904 = vunpack.c.h.s8.bf16 %v658
    %v905 = vunpack.c.l.s8.bf16 %v659
    %v906 = vunpack.c.l.s8.bf16 %v660
    %v907 = vunpack.c.l.s8.bf16 %v661
    %v908 = vunpack.c.l.s8.bf16 %v662
    %v909 = vunpack.c.l.s8.bf16 %v663
    %v910 = vunpack.c.l.s8.bf16 %v664
    %v911 = vunpack.c.h.s8.bf16 %v659
    %v912 = vunpack.c.h.s8.bf16 %v660
    %v913 = vunpack.c.h.s8.bf16 %v661
    %v914 = vunpack.c.h.s8.bf16 %v662
    %v915 = vunpack.c.h.s8.bf16 %v663
    %v916 = vunpack.c.h.s8.bf16 %v664
    %v917 = vunpack.c.l.s8.bf16 %v665
    %v918 = vunpack.c.l.s8.bf16 %v666
    %v919 = vunpack.c.l.s8.bf16 %v667
    %v920 = vunpack.c.l.s8.bf16 %v668
    %v921 = vunpack.c.l.s8.bf16 %v669
    %v922 = vunpack.c.l.s8.bf16 %v670
    %v923 = vunpack.c.h.s8.bf16 %v665
    %v924 = vunpack.c.h.s8.bf16 %v666
    %v925 = vunpack.c.h.s8.bf16 %v667
    %v926 = vunpack.c.h.s8.bf16 %v668
    %v927 = vunpack.c.h.s8.bf16 %v669
    %v928 = vunpack.c.h.s8.bf16 %v670
    %v929 = vunpack.c.l.s8.bf16 %v671
    %v930 = vunpack.c.l.s8.bf16 %v672
    %v931 = vunpack.c.l.s8.bf16 %v673
    %v932 = vunpack.c.l.s8.bf16 %v674
    %v933 = vunpack.c.l.s8.bf16 %v675
    %v934 = vunpack.c.l.s8.bf16 %v676
    %v935 = vunpack.c.h.s8.bf16 %v671
    %v936 = vunpack.c.h.s8.bf16 %v672
    %v937 = vunpack.c.h.s8.bf16 %v673
    %v938 = vunpack.c.h.s8.bf16 %v674
    %v939 = vunpack.c.h.s8.bf16 %v675
    %v940 = vunpack.c.h.s8.bf16 %v676
    %v941 = vunpack.c.l.s8.bf16 %v677
    %v942 = vunpack.c.l.s8.bf16 %v678
    %v943 = vunpack.c.l.s8.bf16 %v679
    %v944 = vunpack.c.l.s8.bf16 %v680
    %v945 = vunpack.c.l.s8.bf16 %v681
    %v946 = vunpack.c.l.s8.bf16 %v682
    %v947 = vunpack.c.h.s8.bf16 %v677
    %v948 = vunpack.c.h.s8.bf16 %v678
    %v949 = vunpack.c.h.s8.bf16 %v679
    %v950 = vunpack.c.h.s8.bf16 %v680
    %v951 = vunpack.c.h.s8.bf16 %v681
    %v952 = vunpack.c.h.s8.bf16 %v682
    %v953 = vunpack.c.l.s8.bf16 %v683
    %v954 = vunpack.c.l.s8.bf16 %v684
    %v955 = vunpack.c.l.s8.bf16 %v685
    %v956 = vunpack.c.l.s8.bf16 %v686
    %v957 = vunpack.c.l.s8.bf16 %v687
    %v958 = vunpack.c.l.s8.bf16 %v688
    %v959 = vunpack.c.h.s8.bf16 %v683
    %v960 = vunpack.c.h.s8.bf16 %v684
    %v961 = vunpack.c.h.s8.bf16 %v685
    %v962 = vunpack.c.h.s8.bf16 %v686
    %v963 = vunpack.c.h.s8.bf16 %v687
    %v964 = vunpack.c.h.s8.bf16 %v688
    %v965 = vunpack.c.l.s8.bf16 %v689
    %v966 = vunpack.c.l.s8.bf16 %v690
    %v967 = vunpack.c.l.s8.bf16 %v691
    %v968 = vunpack.c.l.s8.bf16 %v692
    %v969 = vunpack.c.l.s8.bf16 %v693
    %v970 = vunpack.c.l.s8.bf16 %v694
    %v971 = vunpack.c.h.s8.bf16 %v689
    %v972 = vunpack.c.h.s8.bf16 %v690
    %v973 = vunpack.c.h.s8.bf16 %v691
    %v974 = vunpack.c.h.s8.bf16 %v692
    %v975 = vunpack.c.h.s8.bf16 %v693
    %v976 = vunpack.c.h.s8.bf16 %v694
    %v977 = vunpack.c.l.s8.bf16 %v695
    %v978 = vunpack.c.l.s8.bf16 %v696
    %v979 = vunpack.c.l.s8.bf16 %v697
    %v980 = vunpack.c.l.s8.bf16 %v698
    %v981 = vunpack.c.l.s8.bf16 %v699
    %v982 = vunpack.c.l.s8.bf16 %v700
    %v983 = vunpack.c.h.s8.bf16 %v695
    %v984 = vunpack.c.h.s8.bf16 %v696
    %v985 = vunpack.c.h.s8.bf16 %v697
    %v986 = vunpack.c.h.s8.bf16 %v698
    %v987 = vunpack.c.h.s8.bf16 %v699
    %v988 = vunpack.c.h.s8.bf16 %v700
    %v989 = vpack.c.bf16 %v551, %v551
    %v990 = vpack.c.bf16 %v552, %v552
    %v991 = vpack.c.bf16 %v553, %v553
    %v992 = vpack.c.bf16 %v554, %v554
    %v993 = vpack.c.bf16 %v555, %v555
    %v994 = vpack.c.bf16 %v556, %v556
    %995 = vmatprep.subr.bf16.mxu0 %v744
    %996 = vmatpush1.bf16.msra.mxu0 %v743
    %997 = vmatprep.subr.bf16.mxu0 %v738
    %998 = vmatpush1.bf16.msra.mxu0 %v737
    %999 = vmatprep.subr.bf16.mxu0 %v732
    %1000 = vmatpush1.bf16.msra.mxu0 %v731
    %1001 = vmatprep.subr.bf16.mxu0 %v726
    %1002 = vmatpush1.bf16.msra.mxu0 %v725
    %1003 = vmatprep.subr.bf16.mxu0 %v720
    %1004 = vmatpush1.bf16.msra.mxu0 %v719
    %1005 = vmatprep.subr.bf16.mxu0 %v714
    %1006 = vmatpush1.bf16.msra.mxu0 %v713
    %1007 = vmatprep.subr.bf16.mxu0 %v708
    %1008 = vmatpush1.bf16.msra.mxu0 %v707
    %1009 = vmatprep.subr.bf16.mxu0 %v702
    %1010 = vmatpush1.bf16.msra.mxu0 %v701
    %1011 = vmatprep.subr.bf16.mxu0 %v792
    %1012 = vmatpush2.bf16.msra.mxu0 %v791
    %1013 = vmatprep.subr.bf16.mxu0 %v786
    %1014 = vmatpush2.bf16.msra.mxu0 %v785
    %1015 = vmatprep.subr.bf16.mxu0 %v780
    %1016 = vmatpush2.bf16.msra.mxu0 %v779
    %1017 = vmatprep.subr.bf16.mxu0 %v774
    %1018 = vmatpush2.bf16.msra.mxu0 %v773
    %1019 = vmatprep.subr.bf16.mxu0 %v768
    %1020 = vmatpush2.bf16.msra.mxu0 %v767
    %1021 = vmatprep.subr.bf16.mxu0 %v762
    %1022 = vmatpush2.bf16.msra.mxu0 %v761
    %1023 = vmatprep.subr.bf16.mxu0 %v756
    %1024 = vmatpush2.bf16.msra.mxu0 %v755
    %1025 = vmatprep.subr.bf16.mxu0 %v750
    %1026 = vmatpush2.bf16.msra.mxu0 %v749
    %1027 = vmatprep.mubr.bf16.mxu0 %v990
    %1028 = vmatmul.mubr.bf16.gmra.mxu0 %v989
    %v1029 = vpop.f32.mrf.mxu0
    %v1030 = vadd.f32 0.0, %v1029
    %v1031 = vpop.f32.mrf.mxu0
    %v1032 = vadd.f32 0.0, %v1031
    %v1033 = vpop.f32.mrf.mxu0
    %v1034 = vpop.f32.mrf.mxu0
    %1035 = vdwg.mxu0
    %1036 = vmatprep.subr.bf16.mxu0 %v840
    %1037 = vmatpush1.bf16.msra.mxu0 %v839
    %1038 = vmatprep.subr.bf16.mxu0 %v834
    %1039 = vmatpush1.bf16.msra.mxu0 %v833
    %1040 = vmatprep.subr.bf16.mxu0 %v828
    %1041 = vmatpush1.bf16.msra.mxu0 %v827
    %1042 = vmatprep.subr.bf16.mxu0 %v822
    %1043 = vmatpush1.bf16.msra.mxu0 %v821
    %1044 = vmatprep.subr.bf16.mxu0 %v816
    %1045 = vmatpush1.bf16.msra.mxu0 %v815
    %1046 = vmatprep.subr.bf16.mxu0 %v810
    %1047 = vmatpush1.bf16.msra.mxu0 %v809
    %1048 = vmatprep.subr.bf16.mxu0 %v804
    %1049 = vmatpush1.bf16.msra.mxu0 %v803
    %1050 = vmatprep.subr.bf16.mxu0 %v798
    %1051 = vmatpush1.bf16.msra.mxu0 %v797
    %1052 = vmatprep.subr.bf16.mxu0 %v888
    %1053 = vmatpush2.bf16.msra.mxu0 %v887
    %1054 = vmatprep.subr.bf16.mxu0 %v882
    %1055 = vmatpush2.bf16.msra.mxu0 %v881
    %1056 = vmatprep.subr.bf16.mxu0 %v876
    %1057 = vmatpush2.bf16.msra.mxu0 %v875
    %1058 = vmatprep.subr.bf16.mxu0 %v870
    %1059 = vmatpush2.bf16.msra.mxu0 %v869
    %1060 = vmatprep.subr.bf16.mxu0 %v864
    %1061 = vmatpush2.bf16.msra.mxu0 %v863
    %1062 = vmatprep.subr.bf16.mxu0 %v858
    %1063 = vmatpush2.bf16.msra.mxu0 %v857
    %1064 = vmatprep.subr.bf16.mxu0 %v852
    %1065 = vmatpush2.bf16.msra.mxu0 %v851
    %1066 = vmatprep.subr.bf16.mxu0 %v846
    %1067 = vmatpush2.bf16.msra.mxu0 %v845
    %1068 = vmatprep.mubr.bf16.mxu0 %v992
    %1069 = vmatmul.mubr.bf16.gmra.mxu0 %v991
    %v1070 = vpop.f32.mrf.mxu0
    %v1071 = vadd.f32 %v1030, %v1070
    %v1072 = vpop.f32.mrf.mxu0
    %v1073 = vadd.f32 %v1032, %v1072
    %v1074 = vpop.f32.mrf.mxu0
    %v1075 = vpop.f32.mrf.mxu0
    %1076 = vdwg.mxu0
    %1077 = vmatprep.subr.bf16.mxu0 %v936
    %1078 = vmatpush1.bf16.msra.mxu0 %v935
    %1079 = vmatprep.subr.bf16.mxu0 %v930
    %1080 = vmatpush1.bf16.msra.mxu0 %v929
    %1081 = vmatprep.subr.bf16.mxu0 %v924
    %1082 = vmatpush1.bf16.msra.mxu0 %v923
    %1083 = vmatprep.subr.bf16.mxu0 %v918
    %1084 = vmatpush1.bf16.msra.mxu0 %v917
    %1085 = vmatprep.subr.bf16.mxu0 %v912
    %1086 = vmatpush1.bf16.msra.mxu0 %v911
    %1087 = vmatprep.subr.bf16.mxu0 %v906
    %1088 = vmatpush1.bf16.msra.mxu0 %v905
    %1089 = vmatprep.subr.bf16.mxu0 %v900
    %1090 = vmatpush1.bf16.msra.mxu0 %v899
    %1091 = vmatprep.subr.bf16.mxu0 %v894
    %1092 = vmatpush1.bf16.msra.mxu0 %v893
    %1093 = vmatprep.subr.bf16.mxu0 %v984
    %1094 = vmatpush2.bf16.msra.mxu0 %v983
    %1095 = vmatprep.subr.bf16.mxu0 %v978
    %1096 = vmatpush2.bf16.msra.mxu0 %v977
    %1097 = vmatprep.subr.bf16.mxu0 %v972
    %1098 = vmatpush2.bf16.msra.mxu0 %v971
    %1099 = vmatprep.subr.bf16.mxu0 %v966
    %1100 = vmatpush2.bf16.msra.mxu0 %v965
    %1101 = vmatprep.subr.bf16.mxu0 %v960
    %1102 = vmatpush2.bf16.msra.mxu0 %v959
    %1103 = vmatprep.subr.bf16.mxu0 %v954
    %1104 = vmatpush2.bf16.msra.mxu0 %v953
    %1105 = vmatprep.subr.bf16.mxu0 %v948
    %1106 = vmatpush2.bf16.msra.mxu0 %v947
    %1107 = vmatprep.subr.bf16.mxu0 %v942
    %1108 = vmatpush2.bf16.msra.mxu0 %v941
    %1109 = vmatprep.mubr.bf16.mxu0 %v994
    %1110 = vmatmul.mubr.bf16.gmra.mxu0 %v993
    %v1111 = vpop.f32.mrf.mxu0
    %v1112 = vadd.f32 %v1071, %v1111
    %v1113 = vpop.f32.mrf.mxu0
    %v1114 = vadd.f32 %v1073, %v1113
    %v1115 = vpop.f32.mrf.mxu0
    %v1116 = vpop.f32.mrf.mxu0
    %1117 = vdwg.mxu0
    %1118 = vmatprep.subr.bf16.mxu0 %v746
    %1119 = vmatpush1.bf16.msra.mxu0 %v745
    %1120 = vmatprep.subr.bf16.mxu0 %v740
    %1121 = vmatpush1.bf16.msra.mxu0 %v739
    %1122 = vmatprep.subr.bf16.mxu0 %v734
    %1123 = vmatpush1.bf16.msra.mxu0 %v733
    %1124 = vmatprep.subr.bf16.mxu0 %v728
    %1125 = vmatpush1.bf16.msra.mxu0 %v727
    %1126 = vmatprep.subr.bf16.mxu0 %v722
    %1127 = vmatpush1.bf16.msra.mxu0 %v721
    %1128 = vmatprep.subr.bf16.mxu0 %v716
    %1129 = vmatpush1.bf16.msra.mxu0 %v715
    %1130 = vmatprep.subr.bf16.mxu0 %v710
    %1131 = vmatpush1.bf16.msra.mxu0 %v709
    %1132 = vmatprep.subr.bf16.mxu0 %v704
    %1133 = vmatpush1.bf16.msra.mxu0 %v703
    %1134 = vmatprep.subr.bf16.mxu0 %v794
    %1135 = vmatpush2.bf16.msra.mxu0 %v793
    %1136 = vmatprep.subr.bf16.mxu0 %v788
    %1137 = vmatpush2.bf16.msra.mxu0 %v787
    %1138 = vmatprep.subr.bf16.mxu0 %v782
    %1139 = vmatpush2.bf16.msra.mxu0 %v781
    %1140 = vmatprep.subr.bf16.mxu0 %v776
    %1141 = vmatpush2.bf16.msra.mxu0 %v775
    %1142 = vmatprep.subr.bf16.mxu0 %v770
    %1143 = vmatpush2.bf16.msra.mxu0 %v769
    %1144 = vmatprep.subr.bf16.mxu0 %v764
    %1145 = vmatpush2.bf16.msra.mxu0 %v763
    %1146 = vmatprep.subr.bf16.mxu0 %v758
    %1147 = vmatpush2.bf16.msra.mxu0 %v757
    %1148 = vmatprep.subr.bf16.mxu0 %v752
    %1149 = vmatpush2.bf16.msra.mxu0 %v751
    %1150 = vmatprep.mubr.bf16.mxu0 %v990
    %1151 = vmatmul.mubr.bf16.gmra.mxu0 %v989
    %v1152 = vpop.f32.mrf.mxu0
    %v1153 = vadd.f32 0.0, %v1152
    %v1154 = vpop.f32.mrf.mxu0
    %v1155 = vadd.f32 0.0, %v1154
    %v1156 = vpop.f32.mrf.mxu0
    %v1157 = vpop.f32.mrf.mxu0
    %1158 = vdwg.mxu0
    %1159 = vmatprep.subr.bf16.mxu0 %v842
    %1160 = vmatpush1.bf16.msra.mxu0 %v841
    %1161 = vmatprep.subr.bf16.mxu0 %v836
    %1162 = vmatpush1.bf16.msra.mxu0 %v835
    %1163 = vmatprep.subr.bf16.mxu0 %v830
    %1164 = vmatpush1.bf16.msra.mxu0 %v829
    %1165 = vmatprep.subr.bf16.mxu0 %v824
    %1166 = vmatpush1.bf16.msra.mxu0 %v823
    %1167 = vmatprep.subr.bf16.mxu0 %v818
    %1168 = vmatpush1.bf16.msra.mxu0 %v817
    %1169 = vmatprep.subr.bf16.mxu0 %v812
    %1170 = vmatpush1.bf16.msra.mxu0 %v811
    %1171 = vmatprep.subr.bf16.mxu0 %v806
    %1172 = vmatpush1.bf16.msra.mxu0 %v805
    %1173 = vmatprep.subr.bf16.mxu0 %v800
    %1174 = vmatpush1.bf16.msra.mxu0 %v799
    %1175 = vmatprep.subr.bf16.mxu0 %v890
    %1176 = vmatpush2.bf16.msra.mxu0 %v889
    %1177 = vmatprep.subr.bf16.mxu0 %v884
    %1178 = vmatpush2.bf16.msra.mxu0 %v883
    %1179 = vmatprep.subr.bf16.mxu0 %v878
    %1180 = vmatpush2.bf16.msra.mxu0 %v877
    %1181 = vmatprep.subr.bf16.mxu0 %v872
    %1182 = vmatpush2.bf16.msra.mxu0 %v871
    %1183 = vmatprep.subr.bf16.mxu0 %v866
    %1184 = vmatpush2.bf16.msra.mxu0 %v865
    %1185 = vmatprep.subr.bf16.mxu0 %v860
    %1186 = vmatpush2.bf16.msra.mxu0 %v859
    %1187 = vmatprep.subr.bf16.mxu0 %v854
    %1188 = vmatpush2.bf16.msra.mxu0 %v853
    %1189 = vmatprep.subr.bf16.mxu0 %v848
    %1190 = vmatpush2.bf16.msra.mxu0 %v847
    %1191 = vmatprep.mubr.bf16.mxu0 %v992
    %1192 = vmatmul.mubr.bf16.gmra.mxu0 %v991
    %v1193 = vpop.f32.mrf.mxu0
    %v1194 = vadd.f32 %v1153, %v1193
    %v1195 = vpop.f32.mrf.mxu0
    %v1196 = vadd.f32 %v1155, %v1195
    %v1197 = vpop.f32.mrf.mxu0
    %v1198 = vpop.f32.mrf.mxu0
    %1199 = vdwg.mxu0
    %1200 = vmatprep.subr.bf16.mxu0 %v938
    %1201 = vmatpush1.bf16.msra.mxu0 %v937
    %1202 = vmatprep.subr.bf16.mxu0 %v932
    %1203 = vmatpush1.bf16.msra.mxu0 %v931
    %1204 = vmatprep.subr.bf16.mxu0 %v926
    %1205 = vmatpush1.bf16.msra.mxu0 %v925
    %1206 = vmatprep.subr.bf16.mxu0 %v920
    %1207 = vmatpush1.bf16.msra.mxu0 %v919
    %1208 = vmatprep.subr.bf16.mxu0 %v914
    %1209 = vmatpush1.bf16.msra.mxu0 %v913
    %1210 = vmatprep.subr.bf16.mxu0 %v908
    %1211 = vmatpush1.bf16.msra.mxu0 %v907
    %1212 = vmatprep.subr.bf16.mxu0 %v902
    %1213 = vmatpush1.bf16.msra.mxu0 %v901
    %1214 = vmatprep.subr.bf16.mxu0 %v896
    %1215 = vmatpush1.bf16.msra.mxu0 %v895
    %1216 = vmatprep.subr.bf16.mxu0 %v986
    %1217 = vmatpush2.bf16.msra.mxu0 %v985
    %1218 = vmatprep.subr.bf16.mxu0 %v980
    %1219 = vmatpush2.bf16.msra.mxu0 %v979
    %1220 = vmatprep.subr.bf16.mxu0 %v974
    %1221 = vmatpush2.bf16.msra.mxu0 %v973
    %1222 = vmatprep.subr.bf16.mxu0 %v968
    %1223 = vmatpush2.bf16.msra.mxu0 %v967
    %1224 = vmatprep.subr.bf16.mxu0 %v962
    %1225 = vmatpush2.bf16.msra.mxu0 %v961
    %1226 = vmatprep.subr.bf16.mxu0 %v956
    %1227 = vmatpush2.bf16.msra.mxu0 %v955
    %1228 = vmatprep.subr.bf16.mxu0 %v950
    %1229 = vmatpush2.bf16.msra.mxu0 %v949
    %1230 = vmatprep.subr.bf16.mxu0 %v944
    %1231 = vmatpush2.bf16.msra.mxu0 %v943
    %1232 = vmatprep.mubr.bf16.mxu0 %v994
    %1233 = vmatmul.mubr.bf16.gmra.mxu0 %v993
    %v1234 = vpop.f32.mrf.mxu0
    %v1235 = vadd.f32 %v1194, %v1234
    %v1236 = vpop.f32.mrf.mxu0
    %v1237 = vadd.f32 %v1196, %v1236
    %v1238 = vpop.f32.mrf.mxu0
    %v1239 = vpop.f32.mrf.mxu0
    %1240 = vdwg.mxu0
    %1241 = vmatprep.subr.bf16.mxu0 %v748
    %1242 = vmatpush1.bf16.msra.mxu0 %v747
    %1243 = vmatprep.subr.bf16.mxu0 %v742
    %1244 = vmatpush1.bf16.msra.mxu0 %v741
    %1245 = vmatprep.subr.bf16.mxu0 %v736
    %1246 = vmatpush1.bf16.msra.mxu0 %v735
    %1247 = vmatprep.subr.bf16.mxu0 %v730
    %1248 = vmatpush1.bf16.msra.mxu0 %v729
    %1249 = vmatprep.subr.bf16.mxu0 %v724
    %1250 = vmatpush1.bf16.msra.mxu0 %v723
    %1251 = vmatprep.subr.bf16.mxu0 %v718
    %1252 = vmatpush1.bf16.msra.mxu0 %v717
    %1253 = vmatprep.subr.bf16.mxu0 %v712
    %1254 = vmatpush1.bf16.msra.mxu0 %v711
    %1255 = vmatprep.subr.bf16.mxu0 %v706
    %1256 = vmatpush1.bf16.msra.mxu0 %v705
    %1257 = vmatprep.subr.bf16.mxu0 %v796
    %1258 = vmatpush2.bf16.msra.mxu0 %v795
    %1259 = vmatprep.subr.bf16.mxu0 %v790
    %1260 = vmatpush2.bf16.msra.mxu0 %v789
    %1261 = vmatprep.subr.bf16.mxu0 %v784
    %1262 = vmatpush2.bf16.msra.mxu0 %v783
    %1263 = vmatprep.subr.bf16.mxu0 %v778
    %1264 = vmatpush2.bf16.msra.mxu0 %v777
    %1265 = vmatprep.subr.bf16.mxu0 %v772
    %1266 = vmatpush2.bf16.msra.mxu0 %v771
    %1267 = vmatprep.subr.bf16.mxu0 %v766
    %1268 = vmatpush2.bf16.msra.mxu0 %v765
    %1269 = vmatprep.subr.bf16.mxu0 %v760
    %1270 = vmatpush2.bf16.msra.mxu0 %v759
    %1271 = vmatprep.subr.bf16.mxu0 %v754
    %1272 = vmatpush2.bf16.msra.mxu0 %v753
    %1273 = vmatprep.mubr.bf16.mxu0 %v990
    %1274 = vmatmul.mubr.bf16.gmra.mxu0 %v989
    %v1275 = vpop.f32.mrf.mxu0
    %v1276 = vadd.f32 0.0, %v1275
    %v1277 = vpop.f32.mrf.mxu0
    %v1278 = vadd.f32 0.0, %v1277
    %v1279 = vpop.f32.mrf.mxu0
    %v1280 = vpop.f32.mrf.mxu0
    %1281 = vdwg.mxu0
    %1282 = vmatprep.subr.bf16.mxu0 %v844
    %1283 = vmatpush1.bf16.msra.mxu0 %v843
    %1284 = vmatprep.subr.bf16.mxu0 %v838
    %1285 = vmatpush1.bf16.msra.mxu0 %v837
    %1286 = vmatprep.subr.bf16.mxu0 %v832
    %1287 = vmatpush1.bf16.msra.mxu0 %v831
    %1288 = vmatprep.subr.bf16.mxu0 %v826
    %1289 = vmatpush1.bf16.msra.mxu0 %v825
    %1290 = vmatprep.subr.bf16.mxu0 %v820
    %1291 = vmatpush1.bf16.msra.mxu0 %v819
    %1292 = vmatprep.subr.bf16.mxu0 %v814
    %1293 = vmatpush1.bf16.msra.mxu0 %v813
    %1294 = vmatprep.subr.bf16.mxu0 %v808
    %1295 = vmatpush1.bf16.msra.mxu0 %v807
    %1296 = vmatprep.subr.bf16.mxu0 %v802
    %1297 = vmatpush1.bf16.msra.mxu0 %v801
    %1298 = vmatprep.subr.bf16.mxu0 %v892
    %1299 = vmatpush2.bf16.msra.mxu0 %v891
    %1300 = vmatprep.subr.bf16.mxu0 %v886
    %1301 = vmatpush2.bf16.msra.mxu0 %v885
    %1302 = vmatprep.subr.bf16.mxu0 %v880
    %1303 = vmatpush2.bf16.msra.mxu0 %v879
    %1304 = vmatprep.subr.bf16.mxu0 %v874
    %1305 = vmatpush2.bf16.msra.mxu0 %v873
    %1306 = vmatprep.subr.bf16.mxu0 %v868
    %1307 = vmatpush2.bf16.msra.mxu0 %v867
    %1308 = vmatprep.subr.bf16.mxu0 %v862
    %1309 = vmatpush2.bf16.msra.mxu0 %v861
    %1310 = vmatprep.subr.bf16.mxu0 %v856
    %1311 = vmatpush2.bf16.msra.mxu0 %v855
    %1312 = vmatprep.subr.bf16.mxu0 %v850
    %1313 = vmatpush2.bf16.msra.mxu0 %v849
    %1314 = vmatprep.mubr.bf16.mxu0 %v992
    %1315 = vmatmul.mubr.bf16.gmra.mxu0 %v991
    %v1316 = vpop.f32.mrf.mxu0
    %v1317 = vadd.f32 %v1276, %v1316
    %v1318 = vpop.f32.mrf.mxu0
    %v1319 = vadd.f32 %v1278, %v1318
    %v1320 = vpop.f32.mrf.mxu0
    %v1321 = vpop.f32.mrf.mxu0
    %1322 = vdwg.mxu0
    %1323 = vmatprep.subr.bf16.mxu0 %v940
    %1324 = vmatpush1.bf16.msra.mxu0 %v939
    %1325 = vmatprep.subr.bf16.mxu0 %v934
    %1326 = vmatpush1.bf16.msra.mxu0 %v933
    %1327 = vmatprep.subr.bf16.mxu0 %v928
    %1328 = vmatpush1.bf16.msra.mxu0 %v927
    %1329 = vmatprep.subr.bf16.mxu0 %v922
    %1330 = vmatpush1.bf16.msra.mxu0 %v921
    %1331 = vmatprep.subr.bf16.mxu0 %v916
    %1332 = vmatpush1.bf16.msra.mxu0 %v915
    %1333 = vmatprep.subr.bf16.mxu0 %v910
    %1334 = vmatpush1.bf16.msra.mxu0 %v909
    %1335 = vmatprep.subr.bf16.mxu0 %v904
    %1336 = vmatpush1.bf16.msra.mxu0 %v903
    %1337 = vmatprep.subr.bf16.mxu0 %v898
    %1338 = vmatpush1.bf16.msra.mxu0 %v897
    %1339 = vmatprep.subr.bf16.mxu0 %v988
    %1340 = vmatpush2.bf16.msra.mxu0 %v987
    %1341 = vmatprep.subr.bf16.mxu0 %v982
    %1342 = vmatpush2.bf16.msra.mxu0 %v981
    %1343 = vmatprep.subr.bf16.mxu0 %v976
    %1344 = vmatpush2.bf16.msra.mxu0 %v975
    %1345 = vmatprep.subr.bf16.mxu0 %v970
    %1346 = vmatpush2.bf16.msra.mxu0 %v969
    %1347 = vmatprep.subr.bf16.mxu0 %v964
    %1348 = vmatpush2.bf16.msra.mxu0 %v963
    %1349 = vmatprep.subr.bf16.mxu0 %v958
    %1350 = vmatpush2.bf16.msra.mxu0 %v957
    %1351 = vmatprep.subr.bf16.mxu0 %v952
    %1352 = vmatpush2.bf16.msra.mxu0 %v951
    %1353 = vmatprep.subr.bf16.mxu0 %v946
    %1354 = vmatpush2.bf16.msra.mxu0 %v945
    %1355 = vmatprep.mubr.bf16.mxu0 %v994
    %1356 = vmatmul.mubr.bf16.gmra.mxu0 %v993
    %v1357 = vpop.f32.mrf.mxu0
    %v1358 = vadd.f32 %v1317, %v1357
    %v1359 = vpop.f32.mrf.mxu0
    %v1360 = vadd.f32 %v1319, %v1359
    %v1361 = vpop.f32.mrf.mxu0
    %v1362 = vpop.f32.mrf.mxu0
    %1363 = vdwg.mxu0
    %v1364 = vld [vmem:[%s4] sm:$0x3f]
    %v1366 = vlaneseq
    %v1367 = vshrl.u32 %v1366, 7
    %v1368 = vsub.s32 0, %v1367
    %v1369 = vrot.slane %v1364, %v1368
    %v1370 = vlaneseq
    %v1371 = vshrl.u32 %v1370, 7
    %v1372 = vsub.s32 1, %v1371
    %v1373 = vrot.slane %v1364, %v1372
    %v1374 = vlaneseq
    %v1375 = vshrl.u32 %v1374, 7
    %v1376 = vsub.s32 2, %v1375
    %v1377 = vrot.slane %v1364, %v1376
    %v1378 = vlaneseq
    %v1379 = vshrl.u32 %v1378, 7
    %v1380 = vsub.s32 3, %v1379
    %v1381 = vrot.slane %v1364, %v1380
    %v1382 = vlaneseq
    %v1383 = vshrl.u32 %v1382, 7
    %v1384 = vsub.s32 4, %v1383
    %v1385 = vrot.slane %v1364, %v1384
    %v1386 = vlaneseq
    %v1387 = vshrl.u32 %v1386, 7
    %v1388 = vsub.s32 5, %v1387
    %v1389 = vrot.slane %v1364, %v1388
    %v1396 = vmul.f32 %v1112, %v1369
    %v1397 = vmul.f32 %v1114, %v1373
    %v1398 = vmul.f32 %v1235, %v1377
    %v1399 = vmul.f32 %v1237, %v1381
    %v1400 = vmul.f32 %v1358, %v1385
    %v1401 = vmul.f32 %v1360, %v1389
    %v1402 = vld [vmem:[#allocation10] sm:$0x3f]
    %v1404 = vlaneseq
    %v1405 = vshrl.u32 %v1404, 7
    %v1406 = vsub.s32 0, %v1405
    %v1407 = vrot.slane %v1402, %v1406
    %v1408 = vlaneseq
    %v1409 = vshrl.u32 %v1408, 7
    %v1410 = vsub.s32 1, %v1409
    %v1411 = vrot.slane %v1402, %v1410
    %v1412 = vlaneseq
    %v1413 = vshrl.u32 %v1412, 7
    %v1414 = vsub.s32 2, %v1413
    %v1415 = vrot.slane %v1402, %v1414
    %v1416 = vlaneseq
    %v1417 = vshrl.u32 %v1416, 7
    %v1418 = vsub.s32 3, %v1417
    %v1419 = vrot.slane %v1402, %v1418
    %v1420 = vlaneseq
    %v1421 = vshrl.u32 %v1420, 7
    %v1422 = vsub.s32 4, %v1421
    %v1423 = vrot.slane %v1402, %v1422
    %v1424 = vlaneseq
    %v1425 = vshrl.u32 %v1424, 7
    %v1426 = vsub.s32 5, %v1425
    %v1427 = vrot.slane %v1402, %v1426
    %v1434 = vadd.f32 %v1396, %v1407
    %v1435 = vadd.f32 %v1397, %v1411
    %v1436 = vadd.f32 %v1398, %v1415
    %v1437 = vadd.f32 %v1399, %v1419
    %v1438 = vadd.f32 %v1400, %v1423
    %v1439 = vadd.f32 %v1401, %v1427
    %vm1440 = vcmp.gt.f32.partialorder %v1434, 0.0
    %vm1441 = vcmp.gt.f32.partialorder %v1435, 0.0
    %vm1442 = vcmp.gt.f32.partialorder %v1436, 0.0
    %vm1443 = vcmp.gt.f32.partialorder %v1437, 0.0
    %vm1444 = vcmp.gt.f32.partialorder %v1438, 0.0
    %vm1445 = vcmp.gt.f32.partialorder %v1439, 0.0
    %v1446 = vmul.f32 %v1434, 0.2
    %v1447 = vmul.f32 %v1435, 0.2
    %v1448 = vmul.f32 %v1436, 0.2
    %v1449 = vmul.f32 %v1437, 0.2
    %v1450 = vmul.f32 %v1438, 0.2
    %v1451 = vmul.f32 %v1439, 0.2
    %v1452 = vsel %vm1440, %v1434, %v1446
    %v1453 = vsel %vm1441, %v1435, %v1447
    %v1454 = vsel %vm1442, %v1436, %v1448
    %v1455 = vsel %vm1443, %v1437, %v1449
    %v1456 = vsel %vm1444, %v1438, %v1450
    %v1457 = vsel %vm1445, %v1439, %v1451
    %v1458 = vld [vmem:[%s6] sm:$0x3f]
    %v1460 = vlaneseq
    %v1461 = vshrl.u32 %v1460, 7
    %v1462 = vsub.s32 0, %v1461
    %v1463 = vrot.slane %v1458, %v1462
    %v1464 = vlaneseq
    %v1465 = vshrl.u32 %v1464, 7
    %v1466 = vsub.s32 1, %v1465
    %v1467 = vrot.slane %v1458, %v1466
    %v1468 = vlaneseq
    %v1469 = vshrl.u32 %v1468, 7
    %v1470 = vsub.s32 2, %v1469
    %v1471 = vrot.slane %v1458, %v1470
    %v1472 = vlaneseq
    %v1473 = vshrl.u32 %v1472, 7
    %v1474 = vsub.s32 3, %v1473
    %v1475 = vrot.slane %v1458, %v1474
    %v1476 = vlaneseq
    %v1477 = vshrl.u32 %v1476, 7
    %v1478 = vsub.s32 4, %v1477
    %v1479 = vrot.slane %v1458, %v1478
    %v1480 = vlaneseq
    %v1481 = vshrl.u32 %v1480, 7
    %v1482 = vsub.s32 5, %v1481
    %v1483 = vrot.slane %v1458, %v1482
    %v1490 = vmul.f32 %v1452, %v1463
    %v1491 = vmul.f32 %v1453, %v1467
    %v1492 = vmul.f32 %v1454, %v1471
    %v1493 = vmul.f32 %v1455, %v1475
    %v1494 = vmul.f32 %v1456, %v1479
    %v1495 = vmul.f32 %v1457, %v1483
    %v1496 = vadd.f32 %v1490, %v1491
    %v1497 = vadd.f32 %v1496, %v1492
    %v1498 = vadd.f32 %v1497, %v1493
    %v1499 = vadd.f32 %v1498, %v1494
    %v1500 = vadd.f32 %v1499, %v1495
    %1501 = vadd.xlane.f32.xlu0 %v1500
    %v1502 = vpop.xlane.xlu0 %1501
    %v1503 = vld [vmem:[#allocation2] sm:$0x1]
    %v1505 = vlaneseq
    %v1506 = vshrl.u32 %v1505, 7
    %v1507 = vsub.s32 0, %v1506
    %v1508 = vrot.slane %v1503, %v1507
    %v1510 = vadd.f32 %v1502, %v1508
    %v1511 = vxor.u32 %v1510, 2147483648
    %v1512 = vmul.f32 %v1511, 1.442695
    %v1513 = vpow.pop %v1512
    %v1514 = vadd.f32 %v1513, 1.0
    %v1515 = vrcp.pop %v1514
    %v1516 = vmul.f32 1.0, %v1515
    %vm1517 = vcmask 7168
    %1518 = vst.msk [vmem:[%s8] sm:$0xff] %vm1517, %v1516
    // Predicated region
    $region54: #{tpu_custom_call.1} parent=1 // pred_check
      _
    $region55: #{tpu_custom_call.1} parent=1 // pred_check_branch
      %1520 = sbr.rel (0) target = $region57
    $region56: #{tpu_custom_call.1} parent=1 // pred_region
      _
    $region57: #{tpu_custom_call.1} parent=1 // pred_fallthru
      _
    // Predicated region
    $region58: #{tpu_custom_call.1} parent=1 // pred_check
      _
    $region59: #{tpu_custom_call.1} parent=1 // pred_check_branch
      %1522 = sbr.rel (0) target = $region61
    $region60: #{tpu_custom_call.1} parent=1 // pred_region
      _
    $region61: #{tpu_custom_call.1} parent=1 // pred_fallthru
      _
    %1523 = vsyncpa [#allocation4], 1
    %1524 = vsyncpa [#allocation6], 1
    %1525 = vsyncpa [#allocation9], 1

</llo_original>
